<compile_context>
chip_gen: v5e
topology: v5e:2x2
jax: 0.10.0
libtpu: 0.0.40
codegen_flags: <defaults>
</compile_context>

<pallas_src>
import math
import functools

import jax
import jax.numpy as jnp
from jax import lax
from jax.experimental import pallas as pl
from jax.experimental.pallas import tpu as pltpu


def _attention_kernel(num_heads, d_k, compute_dtype,
                      xf_ref,
                      wq_ref, wk_ref, wv_ref, w3_ref, b_ref,
                      out_ref, attn_ref,
                      k_sc, v_sc, ctx_sc):
    """One grid step == (batch b, query tile qt).

    xf_ref  : (S, D)  rows of batch b (index map constant in qt -> DMA'd once)
    w*_ref  : (D, D)  fused projection weights (1/sqrt(d_k) folded into Wq)
    b_ref   : (4, D)  packed f32 biases [q, k, v, out]
    out_ref : (TQ, D) output tile
    attn_ref: (H, TQ, S) attention-weight tile
    k_sc/v_sc: (S, D) scratch -- K/V computed once per batch (qt == 0)
    ctx_sc  : (TQ, D) scratch -- per-head contexts packed for one D-deep matmul
    """
    qt = pl.program_id(1)
    tq, _ = out_ref.shape

    bq = b_ref[0:1, :]
    bk = b_ref[1:2, :]
    bv = b_ref[2:3, :]
    b3 = b_ref[3:4, :]

    # --- K / V projections: once per batch, reused by all query tiles ---
    @pl.when(qt == 0)
    def _():
        xf = xf_ref[...]                                                # (S, D)
        k = jnp.dot(xf, wk_ref[...], preferred_element_type=jnp.float32) + bk
        v = jnp.dot(xf, wv_ref[...], preferred_element_type=jnp.float32) + bv
        k_sc[...] = k.astype(compute_dtype)
        v_sc[...] = v.astype(compute_dtype)

    # --- Q projection for this query tile (scale already folded into Wq) ---
    q_start = pl.multiple_of(qt * tq, tq)
    xq = xf_ref[pl.ds(q_start, tq), :]                                  # (TQ, D)
    q = jnp.dot(xq, wq_ref[...], preferred_element_type=jnp.float32) + bq
    q = q.astype(compute_dtype)

    # --- per-head attention (static unroll: small H, static lane slices) ---
    for h in range(num_heads):
        lo = h * d_k
        qh = q[:, lo:lo + d_k]                                          # (TQ, d_k)
        kh = k_sc[:, lo:lo + d_k]                                       # (S,  d_k)
        vh = v_sc[:, lo:lo + d_k]                                       # (S,  d_k)

        # qh @ kh^T, contracting last dims (no transpose relayout); f32 acc.
        scores = lax.dot_general(qh, kh, (((1,), (1,)), ((), ())),
                                 preferred_element_type=jnp.float32)    # (TQ, S)

        # numerically stable softmax; divide via EUP reciprocal.
        m = jnp.max(scores, axis=-1, keepdims=True)
        e = jnp.exp(scores - m)
        inv_l = pl.reciprocal(jnp.sum(e, axis=-1, keepdims=True), approx=True)
        p = e * inv_l                                                   # (TQ, S)

        attn_ref[h] = p.astype(attn_ref.dtype)

        ctx_h = jnp.dot(p.astype(compute_dtype), vh,
                        preferred_element_type=jnp.float32)             # (TQ, d_k)
        ctx_sc[:, lo:lo + d_k] = ctx_h.astype(compute_dtype)

    # --- single D-deep output projection (full MXU contraction depth) ---
    out = jnp.dot(ctx_sc[...], w3_ref[...],
                  preferred_element_type=jnp.float32) + b3
    out_ref[...] = out.astype(out_ref.dtype)


def _vmem_budget_bytes():
    """~75% of physical VMEM (96 MiB on v5e/v6e, 48 MiB on v7x)."""
    try:
        cap = pltpu.get_tpu_info().vmem_capacity_bytes
    except Exception:
        cap = 64 * 1024 * 1024
    return int(cap) * 3 // 4


def _pick_q_tile(S, max_tile):
    for tq in (512, 256, 128, 64, 32, 16, 8):
        if tq <= max_tile and S % tq == 0:
            return tq
    return S


def _build_call(out_dtype, B, S, D, H, d_k, TQ, n_q_tiles,
                compute_dtype, attn_dtype, vmem_limit, single_buffer_consts):
    kernel = functools.partial(_attention_kernel, H, d_k, compute_dtype)

    def const_spec(shape):
        idx = lambda b, qt: (0,) * len(shape)
        if single_buffer_consts:
            # Constant index map -> never re-fetched; single buffer saves VMEM.
            return pl.BlockSpec(shape, idx, pipeline_mode=pl.Buffered(1))
        return pl.BlockSpec(shape, idx)

    in_specs = [
        pl.BlockSpec((None, S, D), lambda b, qt: (b, 0, 0)),   # x rows of batch b
        const_spec((D, D)),                                    # Wq_eff (scaled)
        const_spec((D, D)),                                    # Wk_eff
        const_spec((D, D)),                                    # Wv_eff
        const_spec((D, D)),                                    # W3
        const_spec((4, D)),                                    # packed biases
    ]
    out_specs = [
        pl.BlockSpec((None, TQ, D), lambda b, qt: (b, qt, 0)),
        pl.BlockSpec((None, H, TQ, S), lambda b, qt: (b, 0, qt, 0)),
    ]
    out_shapes = (
        jax.ShapeDtypeStruct((B, S, D), out_dtype),
        jax.ShapeDtypeStruct((B, H, S, S), attn_dtype),
    )
    scratch = [
        pltpu.VMEM((S, D), compute_dtype),    # K (computed at qt == 0)
        pltpu.VMEM((S, D), compute_dtype),    # V (computed at qt == 0)
        pltpu.VMEM((TQ, D), compute_dtype),   # packed per-head contexts
    ]
    return pl.pallas_call(
        kernel,
        out_shape=out_shapes,
        grid_spec=pltpu.PrefetchScalarGridSpec(
            num_scalar_prefetch=0,
            grid=(B, n_q_tiles),
            in_specs=in_specs,
            out_specs=out_specs,
            scratch_shapes=scratch,
        ),
        compiler_params=pltpu.CompilerParams(
            # b: independent (megacore-parallel); qt: sequential so the K/V
            # scratch filled at qt == 0 is reused by later query tiles.
            dimension_semantics=("parallel", "arbitrary"),
            vmem_limit_bytes=vmem_limit,
        ),
    )


def attention_layer_pallas(x, params, num_heads, *,
                           compute_dtype=jnp.bfloat16,
                           attn_dtype=jnp.bfloat16):
    """x: (B, S, D) float32.  params: weights stored as (D_in, D_out), biases (1, D)."""
    B, S, D = x.shape
    assert D % num_heads == 0, "d_model must be divisible by the number of heads"
    d_k = D // num_heads
    inv_sqrt_dk = 1.0 / math.sqrt(d_k)

    # --- fold the back-to-back linear chains + the 1/sqrt(d_k) scale offline (f32) ---
    wq_eff = (params["wq"] @ params["w0"]) * inv_sqrt_dk
    wk_eff = params["wk"] @ params["w1"]
    wv_eff = params["wv"] @ params["w2"]
    bq_eff = (params["bq"] @ params["w0"] + params["b0"]) * inv_sqrt_dk
    bk_eff = params["bk"] @ params["w1"] + params["b1"]
    bv_eff = params["bv"] @ params["w2"] + params["b2"]

    biases = jnp.concatenate([bq_eff, bk_eff, bv_eff, params["b3"]],
                             axis=0).astype(jnp.float32)                 # (4, D)

    xc = x.astype(compute_dtype)
    wq_eff = wq_eff.astype(compute_dtype)
    wk_eff = wk_eff.astype(compute_dtype)
    wv_eff = wv_eff.astype(compute_dtype)
    w3 = params["w3"].astype(compute_dtype)

    vmem_limit = _vmem_budget_bytes()
    max_tile = 512 if vmem_limit >= 96 * 1024 * 1024 else 256
    TQ = _pick_q_tile(S, max_tile)
    assert S % TQ == 0
    n_q_tiles = S // TQ

    args = (xc, wq_eff, wk_eff, wv_eff, w3, biases)
    try:
        return _build_call(x.dtype, B, S, D, num_heads, d_k, TQ, n_q_tiles,
                           compute_dtype, attn_dtype, vmem_limit,
                           single_buffer_consts=True)(*args)
    except Exception:
        # pipeline_mode=pl.Buffered(1) unsupported on this JAX/Mosaic version;
        # retry with default double-buffering (unrelated errors re-raise here).
        return _build_call(x.dtype, B, S, D, num_heads, d_k, TQ, n_q_tiles,
                           compute_dtype, attn_dtype, vmem_limit,
                           single_buffer_consts=False)(*args)


def _reference(x, params, num_heads):
    """Pure-JAX f32 reference mirroring the PyTorch forward (dropout = identity)."""
    B, S, D = x.shape
    d_k = D // num_heads

    def lin(z, w, b):
        return z @ w + b[0]

    q0 = lin(x, params["wq"], params["bq"])
    k0 = lin(x, params["wk"], params["bk"])
    v0 = lin(x, params["wv"], params["bv"])

    q = lin(q0, params["w0"], params["b0"]).reshape(B, S, num_heads, d_k).transpose(0, 2, 1, 3)
    k = lin(k0, params["w1"], params["b1"]).reshape(B, S, num_heads, d_k).transpose(0, 2, 1, 3)
    v = lin(v0, params["w2"], params["b2"]).reshape(B, S, num_heads, d_k).transpose(0, 2, 1, 3)

    scores = jnp.einsum("bhqd,bhkd->bhqk", q, k) / math.sqrt(d_k)
    attn = jax.nn.softmax(scores, axis=-1)
    ctx = jnp.einsum("bhqk,bhkd->bhqd", attn, v)
    ctx = ctx.transpose(0, 2, 1, 3).reshape(B, S, D)
    out = lin(ctx, params["w3"], params["b3"])
    return out, attn


def init_params(key, d_model):
    """Deterministic PyTorch-like init: U(-1/sqrt(fan_in), 1/sqrt(fan_in))."""
    bound = 1.0 / math.sqrt(d_model)
    names = ["q", "k", "v", "0", "1", "2", "3"]
    params = {}
    for i, n in enumerate(names):
        kw, kb = jax.random.split(jax.random.fold_in(key, i))
        # stored already transposed: (D_in, D_out), so y = x @ W + b
        params[f"w{n}"] = jax.random.uniform(kw, (d_model, d_model),
                                             jnp.float32, -bound, bound)
        params[f"b{n}"] = jax.random.uniform(kb, (1, d_model),
                                             jnp.float32, -bound, bound)
    return params


if __name__ == "__main__":
    B, S, D, H = 2, 8, 32, 4   # batch, seq, d_model, heads  (d_k = 8)

    key = jax.random.PRNGKey(0)
    kx, kp = jax.random.split(key)
    x = jax.random.normal(kx, (B, S, D), dtype=jnp.float32)
    params = init_params(kp, D)

    out, attn = attention_layer_pallas(x, params, H)
    out = jax.block_until_ready(out)
    attn = jax.block_until_ready(attn)

    ref_out, ref_attn = _reference(x, params, H)
    assert out.shape == (B, S, D) and attn.shape == (B, H, S, S)
    # bf16 matmul path (+ bf16 attn storage, approx reciprocal) vs f32 reference.
    assert jnp.allclose(out.astype(jnp.float32), ref_out, atol=3e-2, rtol=3e-2)
    assert jnp.allclose(attn.astype(jnp.float32), ref_attn, atol=2e-2, rtol=2e-2)

    print("KERNEL_OK")
</pallas_src>

<mosaic_0001>
module attributes {stable_mosaic.version = 11 : i64} {
  func.func @_attention_kernel(%arg0: i32, %arg1: i32, %arg2: memref<1x8x32xbf16, #tpu.memory_space<vmem>>, %arg3: memref<32x32xbf16, #tpu.memory_space<vmem>>, %arg4: memref<32x32xbf16, #tpu.memory_space<vmem>>, %arg5: memref<32x32xbf16, #tpu.memory_space<vmem>>, %arg6: memref<32x32xbf16, #tpu.memory_space<vmem>>, %arg7: memref<4x32xf32, #tpu.memory_space<vmem>>, %arg8: memref<1x8x32xf32, #tpu.memory_space<vmem>>, %arg9: memref<1x4x8x8xbf16, #tpu.memory_space<vmem>>, %arg10: memref<8x32xbf16, #tpu.memory_space<vmem>>, %arg11: memref<8x32xbf16, #tpu.memory_space<vmem>>, %arg12: memref<8x32xbf16, #tpu.memory_space<vmem>>) attributes {dimension_semantics = [#tpu.dimension_semantics<parallel>, #tpu.dimension_semantics<arbitrary>], iteration_bounds = array<i64: 2, 1>, scalar_prefetch = 0 : i64, scratch_operands = 3 : i64, tpu.core_type = #tpu.core_type<tc>, window_params = [{transform_indices = @transform_0, window_bounds = array<i64: 1, 8, 32>}, {pipeline_mode = #tpu.pipeline_mode<synchronous>, transform_indices = @transform_1, window_bounds = array<i64: 32, 32>}, {pipeline_mode = #tpu.pipeline_mode<synchronous>, transform_indices = @transform_2, window_bounds = array<i64: 32, 32>}, {pipeline_mode = #tpu.pipeline_mode<synchronous>, transform_indices = @transform_3, window_bounds = array<i64: 32, 32>}, {pipeline_mode = #tpu.pipeline_mode<synchronous>, transform_indices = @transform_4, window_bounds = array<i64: 32, 32>}, {pipeline_mode = #tpu.pipeline_mode<synchronous>, transform_indices = @transform_5, window_bounds = array<i64: 4, 32>}, {transform_indices = @transform_6, window_bounds = array<i64: 1, 8, 32>}, {transform_indices = @transform_7, window_bounds = array<i64: 1, 4, 8, 8>}]} {
    %c0 = arith.constant 0 : index
    %c0_0 = arith.constant 0 : index
    %0 = vector.load %arg7[%c0, %c0_0] : memref<4x32xf32, #tpu.memory_space<vmem>>, vector<1x32xf32>
    %c1 = arith.constant 1 : index
    %c0_1 = arith.constant 0 : index
    %1 = vector.load %arg7[%c1, %c0_1] : memref<4x32xf32, #tpu.memory_space<vmem>>, vector<1x32xf32>
    %c2 = arith.constant 2 : index
    %c0_2 = arith.constant 0 : index
    %2 = vector.load %arg7[%c2, %c0_2] : memref<4x32xf32, #tpu.memory_space<vmem>>, vector<1x32xf32>
    %c3 = arith.constant 3 : index
    %c0_3 = arith.constant 0 : index
    %3 = vector.load %arg7[%c3, %c0_3] : memref<4x32xf32, #tpu.memory_space<vmem>>, vector<1x32xf32>
    %c0_i32 = arith.constant 0 : i32
    %4 = arith.cmpi eq, %arg1, %c0_i32 : i32
    %5 = arith.extui %4 : i1 to i32
    %c0_i32_4 = arith.constant 0 : i32
    %6 = arith.cmpi ne, %5, %c0_i32_4 : i32
    scf.if %6 {
      %c0_70 = arith.constant 0 : index
      %c0_71 = arith.constant 0 : index
      %c0_72 = arith.constant 0 : index
      %113 = vector.load %arg2[%c0_70, %c0_71, %c0_72] : memref<1x8x32xbf16, #tpu.memory_space<vmem>>, vector<1x8x32xbf16>
      %114 = vector.shape_cast %113 : vector<1x8x32xbf16> to vector<8x32xbf16>
      %c0_73 = arith.constant 0 : index
      %c0_74 = arith.constant 0 : index
      %115 = vector.load %arg4[%c0_73, %c0_74] : memref<32x32xbf16, #tpu.memory_space<vmem>>, vector<32x32xbf16>
      %cst_75 = arith.constant dense<0.000000e+00> : vector<8x32xf32>
      %116 = tpu.matmul %114, %115, %cst_75 {dimension_numbers = #tpu.dot_dimension_numbers<[1], [0], [0], [1], [0, 0, 1, 1], [], []>} : vector<8x32xbf16>, vector<32x32xbf16>, vector<8x32xf32> -> vector<8x32xf32>
      %117 = vector.broadcast %1 : vector<1x32xf32> to vector<8x32xf32>
      %118 = arith.addf %116, %117 : vector<8x32xf32>
      %c0_76 = arith.constant 0 : index
      %c0_77 = arith.constant 0 : index
      %119 = vector.load %arg5[%c0_76, %c0_77] : memref<32x32xbf16, #tpu.memory_space<vmem>>, vector<32x32xbf16>
      %cst_78 = arith.constant dense<0.000000e+00> : vector<8x32xf32>
      %120 = tpu.matmul %114, %119, %cst_78 {dimension_numbers = #tpu.dot_dimension_numbers<[1], [0], [0], [1], [0, 0, 1, 1], [], []>} : vector<8x32xbf16>, vector<32x32xbf16>, vector<8x32xf32> -> vector<8x32xf32>
      %121 = vector.broadcast %2 : vector<1x32xf32> to vector<8x32xf32>
      %122 = arith.addf %120, %121 : vector<8x32xf32>
      %123 = arith.truncf %118 : vector<8x32xf32> to vector<8x32xbf16>
      %c0_79 = arith.constant 0 : index
      %c0_80 = arith.constant 0 : index
      %124 = vector.load %arg10[%c0_79, %c0_80] : memref<8x32xbf16, #tpu.memory_space<vmem>>, vector<8x32xbf16>
      tpu.vector_store %arg10[%c0_79, %c0_80], %123 {strides = array<i32>} : memref<8x32xbf16, #tpu.memory_space<vmem>>, vector<8x32xbf16>,
      %125 = arith.truncf %122 : vector<8x32xf32> to vector<8x32xbf16>
      %c0_81 = arith.constant 0 : index
      %c0_82 = arith.constant 0 : index
      %126 = vector.load %arg11[%c0_81, %c0_82] : memref<8x32xbf16, #tpu.memory_space<vmem>>, vector<8x32xbf16>
      tpu.vector_store %arg11[%c0_81, %c0_82], %125 {strides = array<i32>} : memref<8x32xbf16, #tpu.memory_space<vmem>>, vector<8x32xbf16>,
    } else {
    }
    %c8_i32 = arith.constant 8 : i32
    %7 = arith.muli %arg1, %c8_i32 : i32
    %8 = tpu.assume_multiple %7, 8 : i32
    %c0_5 = arith.constant 0 : index
    %9 = arith.index_cast %8 : i32 to index
    %c0_6 = arith.constant 0 : index
    %10 = vector.load %arg2[%c0_5, %9, %c0_6] : memref<1x8x32xbf16, #tpu.memory_space<vmem>>, vector<1x8x32xbf16>
    %11 = vector.shape_cast %10 : vector<1x8x32xbf16> to vector<8x32xbf16>
    %c0_7 = arith.constant 0 : index
    %c0_8 = arith.constant 0 : index
    %12 = vector.load %arg3[%c0_7, %c0_8] : memref<32x32xbf16, #tpu.memory_space<vmem>>, vector<32x32xbf16>
    %cst = arith.constant dense<0.000000e+00> : vector<8x32xf32>
    %13 = tpu.matmul %11, %12, %cst {dimension_numbers = #tpu.dot_dimension_numbers<[1], [0], [0], [1], [0, 0, 1, 1], [], []>} : vector<8x32xbf16>, vector<32x32xbf16>, vector<8x32xf32> -> vector<8x32xf32>
    %14 = vector.broadcast %0 : vector<1x32xf32> to vector<8x32xf32>
    %15 = arith.addf %13, %14 : vector<8x32xf32>
    %16 = arith.truncf %15 : vector<8x32xf32> to vector<8x32xbf16>
    %17 = vector.extract_strided_slice %16 {offsets = [0, 0], sizes = [8, 8], strides = [1, 1]} : vector<8x32xbf16> to vector<8x8xbf16>
    %c0_9 = arith.constant 0 : index
    %c0_10 = arith.constant 0 : index
    %18 = vector.load %arg10[%c0_9, %c0_10] : memref<8x32xbf16, #tpu.memory_space<vmem>>, vector<8x8xbf16>
    %c0_11 = arith.constant 0 : index
    %c0_12 = arith.constant 0 : index
    %19 = vector.load %arg11[%c0_11, %c0_12] : memref<8x32xbf16, #tpu.memory_space<vmem>>, vector<8x8xbf16>
    %cst_13 = arith.constant dense<0.000000e+00> : vector<8x8xf32>
    %20 = tpu.matmul %17, %18, %cst_13 {dimension_numbers = #tpu.dot_dimension_numbers<[1], [1], [0], [0], [0, 0, 1, 0], [], []>} : vector<8x8xbf16>, vector<8x8xbf16>, vector<8x8xf32> -> vector<8x8xf32>
    %cst_14 = arith.constant dense<0xFF800000> : vector<8xf32>
    %21 = vector.multi_reduction <maximumf>, %20, %cst_14 [1] : vector<8x8xf32> to vector<8xf32>
    %22 = vector.shape_cast %21 : vector<8xf32> to vector<8x1xf32>
    %23 = vector.broadcast %22 : vector<8x1xf32> to vector<8x8xf32>
    %24 = arith.subf %20, %23 : vector<8x8xf32>
    %25 = math.exp %24 : vector<8x8xf32>
    %cst_15 = arith.constant dense<0.000000e+00> : vector<8xf32>
    %26 = vector.multi_reduction <add>, %25, %cst_15 [1] : vector<8x8xf32> to vector<8xf32>
    %27 = vector.shape_cast %26 : vector<8xf32> to vector<8x1xf32>
    %28 = tpu.reciprocal %27 {approx = true} : vector<8x1xf32> -> vector<8x1xf32>
    %29 = vector.broadcast %28 : vector<8x1xf32> to vector<8x8xf32>
    %30 = arith.mulf %25, %29 : vector<8x8xf32>
    %31 = arith.truncf %30 : vector<8x8xf32> to vector<8x8xbf16>
    %c0_16 = arith.constant 0 : index
    %c0_17 = arith.constant 0 : index
    %c0_18 = arith.constant 0 : index
    %c0_19 = arith.constant 0 : index
    %32 = vector.load %arg9[%c0_16, %c0_17, %c0_18, %c0_19] : memref<1x4x8x8xbf16, #tpu.memory_space<vmem>>, vector<1x1x8x8xbf16>
    %33 = vector.shape_cast %32 : vector<1x1x8x8xbf16> to vector<8x8xbf16>
    %34 = vector.shape_cast %31 : vector<8x8xbf16> to vector<1x1x8x8xbf16>
    tpu.vector_store %arg9[%c0_16, %c0_17, %c0_18, %c0_19], %34 {strides = array<i32>} : memref<1x4x8x8xbf16, #tpu.memory_space<vmem>>, vector<1x1x8x8xbf16>,
    %35 = arith.truncf %30 : vector<8x8xf32> to vector<8x8xbf16>
    %cst_20 = arith.constant dense<0.000000e+00> : vector<8x8xf32>
    %36 = tpu.matmul %35, %19, %cst_20 {dimension_numbers = #tpu.dot_dimension_numbers<[1], [0], [0], [1], [0, 0, 1, 1], [], []>} : vector<8x8xbf16>, vector<8x8xbf16>, vector<8x8xf32> -> vector<8x8xf32>
    %37 = arith.truncf %36 : vector<8x8xf32> to vector<8x8xbf16>
    %c0_21 = arith.constant 0 : index
    %c0_22 = arith.constant 0 : index
    %38 = vector.load %arg12[%c0_21, %c0_22] : memref<8x32xbf16, #tpu.memory_space<vmem>>, vector<8x8xbf16>
    tpu.vector_store %arg12[%c0_21, %c0_22], %37 {strides = array<i32>} : memref<8x32xbf16, #tpu.memory_space<vmem>>, vector<8x8xbf16>,
    %39 = vector.extract_strided_slice %16 {offsets = [0, 8], sizes = [8, 8], strides = [1, 1]} : vector<8x32xbf16> to vector<8x8xbf16>
    %c0_23 = arith.constant 0 : index
    %c8 = arith.constant 8 : index
    %40 = vector.load %arg10[%c0_23, %c8] : memref<8x32xbf16, #tpu.memory_space<vmem>>, vector<8x8xbf16>
    %c0_24 = arith.constant 0 : index
    %c8_25 = arith.constant 8 : index
    %41 = vector.load %arg11[%c0_24, %c8_25] : memref<8x32xbf16, #tpu.memory_space<vmem>>, vector<8x8xbf16>
    %cst_26 = arith.constant dense<0.000000e+00> : vector<8x8xf32>
    %42 = tpu.matmul %39, %40, %cst_26 {dimension_numbers = #tpu.dot_dimension_numbers<[1], [1], [0], [0], [0, 0, 1, 0], [], []>} : vector<8x8xbf16>, vector<8x8xbf16>, vector<8x8xf32> -> vector<8x8xf32>
    %cst_27 = arith.constant dense<0xFF800000> : vector<8xf32>
    %43 = vector.multi_reduction <maximumf>, %42, %cst_27 [1] : vector<8x8xf32> to vector<8xf32>
    %44 = vector.shape_cast %43 : vector<8xf32> to vector<8x1xf32>
    %45 = vector.broadcast %44 : vector<8x1xf32> to vector<8x8xf32>
    %46 = arith.subf %42, %45 : vector<8x8xf32>
    %47 = math.exp %46 : vector<8x8xf32>
    %cst_28 = arith.constant dense<0.000000e+00> : vector<8xf32>
    %48 = vector.multi_reduction <add>, %47, %cst_28 [1] : vector<8x8xf32> to vector<8xf32>
    %49 = vector.shape_cast %48 : vector<8xf32> to vector<8x1xf32>
    %50 = tpu.reciprocal %49 {approx = true} : vector<8x1xf32> -> vector<8x1xf32>
    %51 = vector.broadcast %50 : vector<8x1xf32> to vector<8x8xf32>
    %52 = arith.mulf %47, %51 : vector<8x8xf32>
    %53 = arith.truncf %52 : vector<8x8xf32> to vector<8x8xbf16>
    %c0_29 = arith.constant 0 : index
    %c1_30 = arith.constant 1 : index
    %c0_31 = arith.constant 0 : index
    %c0_32 = arith.constant 0 : index
    %54 = vector.load %arg9[%c0_29, %c1_30, %c0_31, %c0_32] : memref<1x4x8x8xbf16, #tpu.memory_space<vmem>>, vector<1x1x8x8xbf16>
    %55 = vector.shape_cast %54 : vector<1x1x8x8xbf16> to vector<8x8xbf16>
    %56 = vector.shape_cast %53 : vector<8x8xbf16> to vector<1x1x8x8xbf16>
    tpu.vector_store %arg9[%c0_29, %c1_30, %c0_31, %c0_32], %56 {strides = array<i32>} : memref<1x4x8x8xbf16, #tpu.memory_space<vmem>>, vector<1x1x8x8xbf16>,
    %57 = arith.truncf %52 : vector<8x8xf32> to vector<8x8xbf16>
    %cst_33 = arith.constant dense<0.000000e+00> : vector<8x8xf32>
    %58 = tpu.matmul %57, %41, %cst_33 {dimension_numbers = #tpu.dot_dimension_numbers<[1], [0], [0], [1], [0, 0, 1, 1], [], []>} : vector<8x8xbf16>, vector<8x8xbf16>, vector<8x8xf32> -> vector<8x8xf32>
    %59 = arith.truncf %58 : vector<8x8xf32> to vector<8x8xbf16>
    %c0_34 = arith.constant 0 : index
    %c8_35 = arith.constant 8 : index
    %60 = vector.load %arg12[%c0_34, %c8_35] : memref<8x32xbf16, #tpu.memory_space<vmem>>, vector<8x8xbf16>
    tpu.vector_store %arg12[%c0_34, %c8_35], %59 {strides = array<i32>} : memref<8x32xbf16, #tpu.memory_space<vmem>>, vector<8x8xbf16>,
    %61 = vector.extract_strided_slice %16 {offsets = [0, 16], sizes = [8, 8], strides = [1, 1]} : vector<8x32xbf16> to vector<8x8xbf16>
    %c0_36 = arith.constant 0 : index
    %c16 = arith.constant 16 : index
    %62 = vector.load %arg10[%c0_36, %c16] : memref<8x32xbf16, #tpu.memory_space<vmem>>, vector<8x8xbf16>
    %c0_37 = arith.constant 0 : index
    %c16_38 = arith.constant 16 : index
    %63 = vector.load %arg11[%c0_37, %c16_38] : memref<8x32xbf16, #tpu.memory_space<vmem>>, vector<8x8xbf16>
    %cst_39 = arith.constant dense<0.000000e+00> : vector<8x8xf32>
    %64 = tpu.matmul %61, %62, %cst_39 {dimension_numbers = #tpu.dot_dimension_numbers<[1], [1], [0], [0], [0, 0, 1, 0], [], []>} : vector<8x8xbf16>, vector<8x8xbf16>, vector<8x8xf32> -> vector<8x8xf32>
    %cst_40 = arith.constant dense<0xFF800000> : vector<8xf32>
    %65 = vector.multi_reduction <maximumf>, %64, %cst_40 [1] : vector<8x8xf32> to vector<8xf32>
    %66 = vector.shape_cast %65 : vector<8xf32> to vector<8x1xf32>
    %67 = vector.broadcast %66 : vector<8x1xf32> to vector<8x8xf32>
    %68 = arith.subf %64, %67 : vector<8x8xf32>
    %69 = math.exp %68 : vector<8x8xf32>
    %cst_41 = arith.constant dense<0.000000e+00> : vector<8xf32>
    %70 = vector.multi_reduction <add>, %69, %cst_41 [1] : vector<8x8xf32> to vector<8xf32>
    %71 = vector.shape_cast %70 : vector<8xf32> to vector<8x1xf32>
    %72 = tpu.reciprocal %71 {approx = true} : vector<8x1xf32> -> vector<8x1xf32>
    %73 = vector.broadcast %72 : vector<8x1xf32> to vector<8x8xf32>
    %74 = arith.mulf %69, %73 : vector<8x8xf32>
    %75 = arith.truncf %74 : vector<8x8xf32> to vector<8x8xbf16>
    %c0_42 = arith.constant 0 : index
    %c2_43 = arith.constant 2 : index
    %c0_44 = arith.constant 0 : index
    %c0_45 = arith.constant 0 : index
    %76 = vector.load %arg9[%c0_42, %c2_43, %c0_44, %c0_45] : memref<1x4x8x8xbf16, #tpu.memory_space<vmem>>, vector<1x1x8x8xbf16>
    %77 = vector.shape_cast %76 : vector<1x1x8x8xbf16> to vector<8x8xbf16>
    %78 = vector.shape_cast %75 : vector<8x8xbf16> to vector<1x1x8x8xbf16>
    tpu.vector_store %arg9[%c0_42, %c2_43, %c0_44, %c0_45], %78 {strides = array<i32>} : memref<1x4x8x8xbf16, #tpu.memory_space<vmem>>, vector<1x1x8x8xbf16>,
    %79 = arith.truncf %74 : vector<8x8xf32> to vector<8x8xbf16>
    %cst_46 = arith.constant dense<0.000000e+00> : vector<8x8xf32>
    %80 = tpu.matmul %79, %63, %cst_46 {dimension_numbers = #tpu.dot_dimension_numbers<[1], [0], [0], [1], [0, 0, 1, 1], [], []>} : vector<8x8xbf16>, vector<8x8xbf16>, vector<8x8xf32> -> vector<8x8xf32>
    %81 = arith.truncf %80 : vector<8x8xf32> to vector<8x8xbf16>
    %c0_47 = arith.constant 0 : index
    %c16_48 = arith.constant 16 : index
    %82 = vector.load %arg12[%c0_47, %c16_48] : memref<8x32xbf16, #tpu.memory_space<vmem>>, vector<8x8xbf16>
    tpu.vector_store %arg12[%c0_47, %c16_48], %81 {strides = array<i32>} : memref<8x32xbf16, #tpu.memory_space<vmem>>, vector<8x8xbf16>,
    %83 = vector.extract_strided_slice %16 {offsets = [0, 24], sizes = [8, 8], strides = [1, 1]} : vector<8x32xbf16> to vector<8x8xbf16>
    %c0_49 = arith.constant 0 : index
    %c24 = arith.constant 24 : index
    %84 = vector.load %arg10[%c0_49, %c24] : memref<8x32xbf16, #tpu.memory_space<vmem>>, vector<8x8xbf16>
    %c0_50 = arith.constant 0 : index
    %c24_51 = arith.constant 24 : index
    %85 = vector.load %arg11[%c0_50, %c24_51] : memref<8x32xbf16, #tpu.memory_space<vmem>>, vector<8x8xbf16>
    %cst_52 = arith.constant dense<0.000000e+00> : vector<8x8xf32>
    %86 = tpu.matmul %83, %84, %cst_52 {dimension_numbers = #tpu.dot_dimension_numbers<[1], [1], [0], [0], [0, 0, 1, 0], [], []>} : vector<8x8xbf16>, vector<8x8xbf16>, vector<8x8xf32> -> vector<8x8xf32>
    %cst_53 = arith.constant dense<0xFF800000> : vector<8xf32>
    %87 = vector.multi_reduction <maximumf>, %86, %cst_53 [1] : vector<8x8xf32> to vector<8xf32>
    %88 = vector.shape_cast %87 : vector<8xf32> to vector<8x1xf32>
    %89 = vector.broadcast %88 : vector<8x1xf32> to vector<8x8xf32>
    %90 = arith.subf %86, %89 : vector<8x8xf32>
    %91 = math.exp %90 : vector<8x8xf32>
    %cst_54 = arith.constant dense<0.000000e+00> : vector<8xf32>
    %92 = vector.multi_reduction <add>, %91, %cst_54 [1] : vector<8x8xf32> to vector<8xf32>
    %93 = vector.shape_cast %92 : vector<8xf32> to vector<8x1xf32>
    %94 = tpu.reciprocal %93 {approx = true} : vector<8x1xf32> -> vector<8x1xf32>
    %95 = vector.broadcast %94 : vector<8x1xf32> to vector<8x8xf32>
    %96 = arith.mulf %91, %95 : vector<8x8xf32>
    %97 = arith.truncf %96 : vector<8x8xf32> to vector<8x8xbf16>
    %c0_55 = arith.constant 0 : index
    %c3_56 = arith.constant 3 : index
    %c0_57 = arith.constant 0 : index
    %c0_58 = arith.constant 0 : index
    %98 = vector.load %arg9[%c0_55, %c3_56, %c0_57, %c0_58] : memref<1x4x8x8xbf16, #tpu.memory_space<vmem>>, vector<1x1x8x8xbf16>
    %99 = vector.shape_cast %98 : vector<1x1x8x8xbf16> to vector<8x8xbf16>
    %100 = vector.shape_cast %97 : vector<8x8xbf16> to vector<1x1x8x8xbf16>
    tpu.vector_store %arg9[%c0_55, %c3_56, %c0_57, %c0_58], %100 {strides = array<i32>} : memref<1x4x8x8xbf16, #tpu.memory_space<vmem>>, vector<1x1x8x8xbf16>,
    %101 = arith.truncf %96 : vector<8x8xf32> to vector<8x8xbf16>
    %cst_59 = arith.constant dense<0.000000e+00> : vector<8x8xf32>
    %102 = tpu.matmul %101, %85, %cst_59 {dimension_numbers = #tpu.dot_dimension_numbers<[1], [0], [0], [1], [0, 0, 1, 1], [], []>} : vector<8x8xbf16>, vector<8x8xbf16>, vector<8x8xf32> -> vector<8x8xf32>
    %103 = arith.truncf %102 : vector<8x8xf32> to vector<8x8xbf16>
    %c0_60 = arith.constant 0 : index
    %c24_61 = arith.constant 24 : index
    %104 = vector.load %arg12[%c0_60, %c24_61] : memref<8x32xbf16, #tpu.memory_space<vmem>>, vector<8x8xbf16>
    tpu.vector_store %arg12[%c0_60, %c24_61], %103 {strides = array<i32>} : memref<8x32xbf16, #tpu.memory_space<vmem>>, vector<8x8xbf16>,
    %c0_62 = arith.constant 0 : index
    %c0_63 = arith.constant 0 : index
    %105 = vector.load %arg12[%c0_62, %c0_63] : memref<8x32xbf16, #tpu.memory_space<vmem>>, vector<8x32xbf16>
    %c0_64 = arith.constant 0 : index
    %c0_65 = arith.constant 0 : index
    %106 = vector.load %arg6[%c0_64, %c0_65] : memref<32x32xbf16, #tpu.memory_space<vmem>>, vector<32x32xbf16>
    %cst_66 = arith.constant dense<0.000000e+00> : vector<8x32xf32>
    %107 = tpu.matmul %105, %106, %cst_66 {dimension_numbers = #tpu.dot_dimension_numbers<[1], [0], [0], [1], [0, 0, 1, 1], [], []>} : vector<8x32xbf16>, vector<32x32xbf16>, vector<8x32xf32> -> vector<8x32xf32>
    %108 = vector.broadcast %3 : vector<1x32xf32> to vector<8x32xf32>
    %109 = arith.addf %107, %108 : vector<8x32xf32>
    %c0_67 = arith.constant 0 : index
    %c0_68 = arith.constant 0 : index
    %c0_69 = arith.constant 0 : index
    %110 = vector.load %arg8[%c0_67, %c0_68, %c0_69] : memref<1x8x32xf32, #tpu.memory_space<vmem>>, vector<1x8x32xf32>
    %111 = vector.shape_cast %110 : vector<1x8x32xf32> to vector<8x32xf32>
    %112 = vector.shape_cast %109 : vector<8x32xf32> to vector<1x8x32xf32>
    tpu.vector_store %arg8[%c0_67, %c0_68, %c0_69], %112 {strides = array<i32>} : memref<1x8x32xf32, #tpu.memory_space<vmem>>, vector<1x8x32xf32>,
    return
  }
  func.func @transform_0(%arg0: i32, %arg1: i32) -> (i32, i32, i32) {
    %c0_i32 = arith.constant 0 : i32
    %c0_i32_0 = arith.constant 0 : i32
    %c0_i32_1 = arith.constant 0 : i32
    return %arg0, %c0_i32, %c0_i32_0 : i32, i32, i32
  }
  func.func @transform_1(%arg0: i32, %arg1: i32) -> (i32, i32) {
    %c0_i32 = arith.constant 0 : i32
    %c0_i32_0 = arith.constant 0 : i32
    %c0_i32_1 = arith.constant 0 : i32
    return %c0_i32, %c0_i32_0 : i32, i32
  }
  func.func @transform_2(%arg0: i32, %arg1: i32) -> (i32, i32) {
    %c0_i32 = arith.constant 0 : i32
    %c0_i32_0 = arith.constant 0 : i32
    %c0_i32_1 = arith.constant 0 : i32
    return %c0_i32, %c0_i32_0 : i32, i32
  }
  func.func @transform_3(%arg0: i32, %arg1: i32) -> (i32, i32) {
    %c0_i32 = arith.constant 0 : i32
    %c0_i32_0 = arith.constant 0 : i32
    %c0_i32_1 = arith.constant 0 : i32
    return %c0_i32, %c0_i32_0 : i32, i32
  }
  func.func @transform_4(%arg0: i32, %arg1: i32) -> (i32, i32) {
    %c0_i32 = arith.constant 0 : i32
    %c0_i32_0 = arith.constant 0 : i32
    %c0_i32_1 = arith.constant 0 : i32
    return %c0_i32, %c0_i32_0 : i32, i32
  }
  func.func @transform_5(%arg0: i32, %arg1: i32) -> (i32, i32) {
    %c0_i32 = arith.constant 0 : i32
    %c0_i32_0 = arith.constant 0 : i32
    %c0_i32_1 = arith.constant 0 : i32
    return %c0_i32, %c0_i32_0 : i32, i32
  }
  func.func @transform_6(%arg0: i32, %arg1: i32) -> (i32, i32, i32) {
    %c0_i32 = arith.constant 0 : i32
    %c0_i32_0 = arith.constant 0 : i32
    return %arg0, %arg1, %c0_i32 : i32, i32, i32
  }
  func.func @transform_7(%arg0: i32, %arg1: i32) -> (i32, i32, i32, i32) {
    %c0_i32 = arith.constant 0 : i32
    %c0_i32_0 = arith.constant 0 : i32
    %c0_i32_1 = arith.constant 0 : i32
    return %arg0, %c0_i32, %arg1, %c0_i32_0 : i32, i32, i32, i32
  }
}

module attributes {stable_mosaic.version = 11 : i64} {
  func.func @_attention_kernel(%arg0: i32, %arg1: i32, %arg2: memref<1x8x32xbf16, #tpu.memory_space<vmem>>, %arg3: memref<32x32xbf16, #tpu.memory_space<vmem>>, %arg4: memref<32x32xbf16, #tpu.memory_space<vmem>>, %arg5: memref<32x32xbf16, #tpu.memory_space<vmem>>, %arg6: memref<32x32xbf16, #tpu.memory_space<vmem>>, %arg7: memref<4x32xf32, #tpu.memory_space<vmem>>, %arg8: memref<1x8x32xf32, #tpu.memory_space<vmem>>, %arg9: memref<1x4x8x8xbf16, #tpu.memory_space<vmem>>, %arg10: memref<8x32xbf16, #tpu.memory_space<vmem>>, %arg11: memref<8x32xbf16, #tpu.memory_space<vmem>>, %arg12: memref<8x32xbf16, #tpu.memory_space<vmem>>) attributes {dimension_semantics = [#tpu.dimension_semantics<parallel>, #tpu.dimension_semantics<arbitrary>], iteration_bounds = array<i64: 2, 1>, scalar_prefetch = 0 : i64, scratch_operands = 3 : i64, tpu.core_type = #tpu.core_type<tc>, window_params = [{transform_indices = @transform_0, window_bounds = array<i64: 1, 8, 32>}, {pipeline_mode = #tpu.pipeline_mode<synchronous>, transform_indices = @transform_1, window_bounds = array<i64: 32, 32>}, {pipeline_mode = #tpu.pipeline_mode<synchronous>, transform_indices = @transform_2, window_bounds = array<i64: 32, 32>}, {pipeline_mode = #tpu.pipeline_mode<synchronous>, transform_indices = @transform_3, window_bounds = array<i64: 32, 32>}, {pipeline_mode = #tpu.pipeline_mode<synchronous>, transform_indices = @transform_4, window_bounds = array<i64: 32, 32>}, {pipeline_mode = #tpu.pipeline_mode<synchronous>, transform_indices = @transform_5, window_bounds = array<i64: 4, 32>}, {transform_indices = @transform_6, window_bounds = array<i64: 1, 8, 32>}, {transform_indices = @transform_7, window_bounds = array<i64: 1, 4, 8, 8>}]} {
    %c0 = arith.constant 0 : index
    %c0_0 = arith.constant 0 : index
    %0 = vector.load %arg7[%c0, %c0_0] : memref<4x32xf32, #tpu.memory_space<vmem>>, vector<1x32xf32>
    %c1 = arith.constant 1 : index
    %c0_1 = arith.constant 0 : index
    %1 = vector.load %arg7[%c1, %c0_1] : memref<4x32xf32, #tpu.memory_space<vmem>>, vector<1x32xf32>
    %c2 = arith.constant 2 : index
    %c0_2 = arith.constant 0 : index
    %2 = vector.load %arg7[%c2, %c0_2] : memref<4x32xf32, #tpu.memory_space<vmem>>, vector<1x32xf32>
    %c3 = arith.constant 3 : index
    %c0_3 = arith.constant 0 : index
    %3 = vector.load %arg7[%c3, %c0_3] : memref<4x32xf32, #tpu.memory_space<vmem>>, vector<1x32xf32>
    %c0_i32 = arith.constant 0 : i32
    %4 = arith.cmpi eq, %arg1, %c0_i32 : i32
    %5 = arith.extui %4 : i1 to i32
    %c0_i32_4 = arith.constant 0 : i32
    %6 = arith.cmpi ne, %5, %c0_i32_4 : i32
    scf.if %6 {
      %c0_70 = arith.constant 0 : index
      %c0_71 = arith.constant 0 : index
      %c0_72 = arith.constant 0 : index
      %113 = vector.load %arg2[%c0_70, %c0_71, %c0_72] : memref<1x8x32xbf16, #tpu.memory_space<vmem>>, vector<1x8x32xbf16>
      %114 = vector.shape_cast %113 : vector<1x8x32xbf16> to vector<8x32xbf16>
      %c0_73 = arith.constant 0 : index
      %c0_74 = arith.constant 0 : index
      %115 = vector.load %arg4[%c0_73, %c0_74] : memref<32x32xbf16, #tpu.memory_space<vmem>>, vector<32x32xbf16>
      %cst_75 = arith.constant dense<0.000000e+00> : vector<8x32xf32>
      %116 = tpu.matmul %114, %115, %cst_75 {dimension_numbers = #tpu.dot_dimension_numbers<[1], [0], [0], [1], [0, 0, 1, 1], [], []>} : vector<8x32xbf16>, vector<32x32xbf16>, vector<8x32xf32> -> vector<8x32xf32>
      %117 = vector.broadcast %1 : vector<1x32xf32> to vector<8x32xf32>
      %118 = arith.addf %116, %117 : vector<8x32xf32>
      %c0_76 = arith.constant 0 : index
      %c0_77 = arith.constant 0 : index
      %119 = vector.load %arg5[%c0_76, %c0_77] : memref<32x32xbf16, #tpu.memory_space<vmem>>, vector<32x32xbf16>
      %cst_78 = arith.constant dense<0.000000e+00> : vector<8x32xf32>
      %120 = tpu.matmul %114, %119, %cst_78 {dimension_numbers = #tpu.dot_dimension_numbers<[1], [0], [0], [1], [0, 0, 1, 1], [], []>} : vector<8x32xbf16>, vector<32x32xbf16>, vector<8x32xf32> -> vector<8x32xf32>
      %121 = vector.broadcast %2 : vector<1x32xf32> to vector<8x32xf32>
      %122 = arith.addf %120, %121 : vector<8x32xf32>
      %123 = arith.truncf %118 : vector<8x32xf32> to vector<8x32xbf16>
      %c0_79 = arith.constant 0 : index
      %c0_80 = arith.constant 0 : index
      %124 = vector.load %arg10[%c0_79, %c0_80] : memref<8x32xbf16, #tpu.memory_space<vmem>>, vector<8x32xbf16>
      tpu.vector_store %arg10[%c0_79, %c0_80], %123 {strides = array<i32>} : memref<8x32xbf16, #tpu.memory_space<vmem>>, vector<8x32xbf16>,
      %125 = arith.truncf %122 : vector<8x32xf32> to vector<8x32xbf16>
      %c0_81 = arith.constant 0 : index
      %c0_82 = arith.constant 0 : index
      %126 = vector.load %arg11[%c0_81, %c0_82] : memref<8x32xbf16, #tpu.memory_space<vmem>>, vector<8x32xbf16>
      tpu.vector_store %arg11[%c0_81, %c0_82], %125 {strides = array<i32>} : memref<8x32xbf16, #tpu.memory_space<vmem>>, vector<8x32xbf16>,
    } else {
    }
    %c8_i32 = arith.constant 8 : i32
    %7 = arith.muli %arg1, %c8_i32 : i32
    %8 = tpu.assume_multiple %7, 8 : i32
    %c0_5 = arith.constant 0 : index
    %9 = arith.index_cast %8 : i32 to index
    %c0_6 = arith.constant 0 : index
    %10 = vector.load %arg2[%c0_5, %9, %c0_6] : memref<1x8x32xbf16, #tpu.memory_space<vmem>>, vector<1x8x32xbf16>
    %11 = vector.shape_cast %10 : vector<1x8x32xbf16> to vector<8x32xbf16>
    %c0_7 = arith.constant 0 : index
    %c0_8 = arith.constant 0 : index
    %12 = vector.load %arg3[%c0_7, %c0_8] : memref<32x32xbf16, #tpu.memory_space<vmem>>, vector<32x32xbf16>
    %cst = arith.constant dense<0.000000e+00> : vector<8x32xf32>
    %13 = tpu.matmul %11, %12, %cst {dimension_numbers = #tpu.dot_dimension_numbers<[1], [0], [0], [1], [0, 0, 1, 1], [], []>} : vector<8x32xbf16>, vector<32x32xbf16>, vector<8x32xf32> -> vector<8x32xf32>
    %14 = vector.broadcast %0 : vector<1x32xf32> to vector<8x32xf32>
    %15 = arith.addf %13, %14 : vector<8x32xf32>
    %16 = arith.truncf %15 : vector<8x32xf32> to vector<8x32xbf16>
    %17 = vector.extract_strided_slice %16 {offsets = [0, 0], sizes = [8, 8], strides = [1, 1]} : vector<8x32xbf16> to vector<8x8xbf16>
    %c0_9 = arith.constant 0 : index
    %c0_10 = arith.constant 0 : index
    %18 = vector.load %arg10[%c0_9, %c0_10] : memref<8x32xbf16, #tpu.memory_space<vmem>>, vector<8x8xbf16>
    %c0_11 = arith.constant 0 : index
    %c0_12 = arith.constant 0 : index
    %19 = vector.load %arg11[%c0_11, %c0_12] : memref<8x32xbf16, #tpu.memory_space<vmem>>, vector<8x8xbf16>
    %cst_13 = arith.constant dense<0.000000e+00> : vector<8x8xf32>
    %20 = tpu.matmul %17, %18, %cst_13 {dimension_numbers = #tpu.dot_dimension_numbers<[1], [1], [0], [0], [0, 0, 1, 0], [], []>} : vector<8x8xbf16>, vector<8x8xbf16>, vector<8x8xf32> -> vector<8x8xf32>
    %cst_14 = arith.constant dense<0xFF800000> : vector<8xf32>
    %21 = vector.multi_reduction <maximumf>, %20, %cst_14 [1] : vector<8x8xf32> to vector<8xf32>
    %22 = vector.shape_cast %21 : vector<8xf32> to vector<8x1xf32>
    %23 = vector.broadcast %22 : vector<8x1xf32> to vector<8x8xf32>
    %24 = arith.subf %20, %23 : vector<8x8xf32>
    %25 = math.exp %24 : vector<8x8xf32>
    %cst_15 = arith.constant dense<0.000000e+00> : vector<8xf32>
    %26 = vector.multi_reduction <add>, %25, %cst_15 [1] : vector<8x8xf32> to vector<8xf32>
    %27 = vector.shape_cast %26 : vector<8xf32> to vector<8x1xf32>
    %28 = tpu.reciprocal %27 {approx = true} : vector<8x1xf32> -> vector<8x1xf32>
    %29 = vector.broadcast %28 : vector<8x1xf32> to vector<8x8xf32>
    %30 = arith.mulf %25, %29 : vector<8x8xf32>
    %31 = arith.truncf %30 : vector<8x8xf32> to vector<8x8xbf16>
    %c0_16 = arith.constant 0 : index
    %c0_17 = arith.constant 0 : index
    %c0_18 = arith.constant 0 : index
    %c0_19 = arith.constant 0 : index
    %32 = vector.load %arg9[%c0_16, %c0_17, %c0_18, %c0_19] : memref<1x4x8x8xbf16, #tpu.memory_space<vmem>>, vector<1x1x8x8xbf16>
    %33 = vector.shape_cast %32 : vector<1x1x8x8xbf16> to vector<8x8xbf16>
    %34 = vector.shape_cast %31 : vector<8x8xbf16> to vector<1x1x8x8xbf16>
    tpu.vector_store %arg9[%c0_16, %c0_17, %c0_18, %c0_19], %34 {strides = array<i32>} : memref<1x4x8x8xbf16, #tpu.memory_space<vmem>>, vector<1x1x8x8xbf16>,
    %35 = arith.truncf %30 : vector<8x8xf32> to vector<8x8xbf16>
    %cst_20 = arith.constant dense<0.000000e+00> : vector<8x8xf32>
    %36 = tpu.matmul %35, %19, %cst_20 {dimension_numbers = #tpu.dot_dimension_numbers<[1], [0], [0], [1], [0, 0, 1, 1], [], []>} : vector<8x8xbf16>, vector<8x8xbf16>, vector<8x8xf32> -> vector<8x8xf32>
    %37 = arith.truncf %36 : vector<8x8xf32> to vector<8x8xbf16>
    %c0_21 = arith.constant 0 : index
    %c0_22 = arith.constant 0 : index
    %38 = vector.load %arg12[%c0_21, %c0_22] : memref<8x32xbf16, #tpu.memory_space<vmem>>, vector<8x8xbf16>
    tpu.vector_store %arg12[%c0_21, %c0_22], %37 {strides = array<i32>} : memref<8x32xbf16, #tpu.memory_space<vmem>>, vector<8x8xbf16>,
    %39 = vector.extract_strided_slice %16 {offsets = [0, 8], sizes = [8, 8], strides = [1, 1]} : vector<8x32xbf16> to vector<8x8xbf16>
    %c0_23 = arith.constant 0 : index
    %c8 = arith.constant 8 : index
    %40 = vector.load %arg10[%c0_23, %c8] : memref<8x32xbf16, #tpu.memory_space<vmem>>, vector<8x8xbf16>
    %c0_24 = arith.constant 0 : index
    %c8_25 = arith.constant 8 : index
    %41 = vector.load %arg11[%c0_24, %c8_25] : memref<8x32xbf16, #tpu.memory_space<vmem>>, vector<8x8xbf16>
    %cst_26 = arith.constant dense<0.000000e+00> : vector<8x8xf32>
    %42 = tpu.matmul %39, %40, %cst_26 {dimension_numbers = #tpu.dot_dimension_numbers<[1], [1], [0], [0], [0, 0, 1, 0], [], []>} : vector<8x8xbf16>, vector<8x8xbf16>, vector<8x8xf32> -> vector<8x8xf32>
    %cst_27 = arith.constant dense<0xFF800000> : vector<8xf32>
    %43 = vector.multi_reduction <maximumf>, %42, %cst_27 [1] : vector<8x8xf32> to vector<8xf32>
    %44 = vector.shape_cast %43 : vector<8xf32> to vector<8x1xf32>
    %45 = vector.broadcast %44 : vector<8x1xf32> to vector<8x8xf32>
    %46 = arith.subf %42, %45 : vector<8x8xf32>
    %47 = math.exp %46 : vector<8x8xf32>
    %cst_28 = arith.constant dense<0.000000e+00> : vector<8xf32>
    %48 = vector.multi_reduction <add>, %47, %cst_28 [1] : vector<8x8xf32> to vector<8xf32>
    %49 = vector.shape_cast %48 : vector<8xf32> to vector<8x1xf32>
    %50 = tpu.reciprocal %49 {approx = true} : vector<8x1xf32> -> vector<8x1xf32>
    %51 = vector.broadcast %50 : vector<8x1xf32> to vector<8x8xf32>
    %52 = arith.mulf %47, %51 : vector<8x8xf32>
    %53 = arith.truncf %52 : vector<8x8xf32> to vector<8x8xbf16>
    %c0_29 = arith.constant 0 : index
    %c1_30 = arith.constant 1 : index
    %c0_31 = arith.constant 0 : index
    %c0_32 = arith.constant 0 : index
    %54 = vector.load %arg9[%c0_29, %c1_30, %c0_31, %c0_32] : memref<1x4x8x8xbf16, #tpu.memory_space<vmem>>, vector<1x1x8x8xbf16>
    %55 = vector.shape_cast %54 : vector<1x1x8x8xbf16> to vector<8x8xbf16>
    %56 = vector.shape_cast %53 : vector<8x8xbf16> to vector<1x1x8x8xbf16>
    tpu.vector_store %arg9[%c0_29, %c1_30, %c0_31, %c0_32], %56 {strides = array<i32>} : memref<1x4x8x8xbf16, #tpu.memory_space<vmem>>, vector<1x1x8x8xbf16>,
    %57 = arith.truncf %52 : vector<8x8xf32> to vector<8x8xbf16>
    %cst_33 = arith.constant dense<0.000000e+00> : vector<8x8xf32>
    %58 = tpu.matmul %57, %41, %cst_33 {dimension_numbers = #tpu.dot_dimension_numbers<[1], [0], [0], [1], [0, 0, 1, 1], [], []>} : vector<8x8xbf16>, vector<8x8xbf16>, vector<8x8xf32> -> vector<8x8xf32>
    %59 = arith.truncf %58 : vector<8x8xf32> to vector<8x8xbf16>
    %c0_34 = arith.constant 0 : index
    %c8_35 = arith.constant 8 : index
    %60 = vector.load %arg12[%c0_34, %c8_35] : memref<8x32xbf16, #tpu.memory_space<vmem>>, vector<8x8xbf16>
    tpu.vector_store %arg12[%c0_34, %c8_35], %59 {strides = array<i32>} : memref<8x32xbf16, #tpu.memory_space<vmem>>, vector<8x8xbf16>,
    %61 = vector.extract_strided_slice %16 {offsets = [0, 16], sizes = [8, 8], strides = [1, 1]} : vector<8x32xbf16> to vector<8x8xbf16>
    %c0_36 = arith.constant 0 : index
    %c16 = arith.constant 16 : index
    %62 = vector.load %arg10[%c0_36, %c16] : memref<8x32xbf16, #tpu.memory_space<vmem>>, vector<8x8xbf16>
    %c0_37 = arith.constant 0 : index
    %c16_38 = arith.constant 16 : index
    %63 = vector.load %arg11[%c0_37, %c16_38] : memref<8x32xbf16, #tpu.memory_space<vmem>>, vector<8x8xbf16>
    %cst_39 = arith.constant dense<0.000000e+00> : vector<8x8xf32>
    %64 = tpu.matmul %61, %62, %cst_39 {dimension_numbers = #tpu.dot_dimension_numbers<[1], [1], [0], [0], [0, 0, 1, 0], [], []>} : vector<8x8xbf16>, vector<8x8xbf16>, vector<8x8xf32> -> vector<8x8xf32>
    %cst_40 = arith.constant dense<0xFF800000> : vector<8xf32>
    %65 = vector.multi_reduction <maximumf>, %64, %cst_40 [1] : vector<8x8xf32> to vector<8xf32>
    %66 = vector.shape_cast %65 : vector<8xf32> to vector<8x1xf32>
    %67 = vector.broadcast %66 : vector<8x1xf32> to vector<8x8xf32>
    %68 = arith.subf %64, %67 : vector<8x8xf32>
    %69 = math.exp %68 : vector<8x8xf32>
    %cst_41 = arith.constant dense<0.000000e+00> : vector<8xf32>
    %70 = vector.multi_reduction <add>, %69, %cst_41 [1] : vector<8x8xf32> to vector<8xf32>
    %71 = vector.shape_cast %70 : vector<8xf32> to vector<8x1xf32>
    %72 = tpu.reciprocal %71 {approx = true} : vector<8x1xf32> -> vector<8x1xf32>
    %73 = vector.broadcast %72 : vector<8x1xf32> to vector<8x8xf32>
    %74 = arith.mulf %69, %73 : vector<8x8xf32>
    %75 = arith.truncf %74 : vector<8x8xf32> to vector<8x8xbf16>
    %c0_42 = arith.constant 0 : index
    %c2_43 = arith.constant 2 : index
    %c0_44 = arith.constant 0 : index
    %c0_45 = arith.constant 0 : index
    %76 = vector.load %arg9[%c0_42, %c2_43, %c0_44, %c0_45] : memref<1x4x8x8xbf16, #tpu.memory_space<vmem>>, vector<1x1x8x8xbf16>
    %77 = vector.shape_cast %76 : vector<1x1x8x8xbf16> to vector<8x8xbf16>
    %78 = vector.shape_cast %75 : vector<8x8xbf16> to vector<1x1x8x8xbf16>
    tpu.vector_store %arg9[%c0_42, %c2_43, %c0_44, %c0_45], %78 {strides = array<i32>} : memref<1x4x8x8xbf16, #tpu.memory_space<vmem>>, vector<1x1x8x8xbf16>,
    %79 = arith.truncf %74 : vector<8x8xf32> to vector<8x8xbf16>
    %cst_46 = arith.constant dense<0.000000e+00> : vector<8x8xf32>
    %80 = tpu.matmul %79, %63, %cst_46 {dimension_numbers = #tpu.dot_dimension_numbers<[1], [0], [0], [1], [0, 0, 1, 1], [], []>} : vector<8x8xbf16>, vector<8x8xbf16>, vector<8x8xf32> -> vector<8x8xf32>
    %81 = arith.truncf %80 : vector<8x8xf32> to vector<8x8xbf16>
    %c0_47 = arith.constant 0 : index
    %c16_48 = arith.constant 16 : index
    %82 = vector.load %arg12[%c0_47, %c16_48] : memref<8x32xbf16, #tpu.memory_space<vmem>>, vector<8x8xbf16>
    tpu.vector_store %arg12[%c0_47, %c16_48], %81 {strides = array<i32>} : memref<8x32xbf16, #tpu.memory_space<vmem>>, vector<8x8xbf16>,
    %83 = vector.extract_strided_slice %16 {offsets = [0, 24], sizes = [8, 8], strides = [1, 1]} : vector<8x32xbf16> to vector<8x8xbf16>
    %c0_49 = arith.constant 0 : index
    %c24 = arith.constant 24 : index
    %84 = vector.load %arg10[%c0_49, %c24] : memref<8x32xbf16, #tpu.memory_space<vmem>>, vector<8x8xbf16>
    %c0_50 = arith.constant 0 : index
    %c24_51 = arith.constant 24 : index
    %85 = vector.load %arg11[%c0_50, %c24_51] : memref<8x32xbf16, #tpu.memory_space<vmem>>, vector<8x8xbf16>
    %cst_52 = arith.constant dense<0.000000e+00> : vector<8x8xf32>
    %86 = tpu.matmul %83, %84, %cst_52 {dimension_numbers = #tpu.dot_dimension_numbers<[1], [1], [0], [0], [0, 0, 1, 0], [], []>} : vector<8x8xbf16>, vector<8x8xbf16>, vector<8x8xf32> -> vector<8x8xf32>
    %cst_53 = arith.constant dense<0xFF800000> : vector<8xf32>
    %87 = vector.multi_reduction <maximumf>, %86, %cst_53 [1] : vector<8x8xf32> to vector<8xf32>
    %88 = vector.shape_cast %87 : vector<8xf32> to vector<8x1xf32>
    %89 = vector.broadcast %88 : vector<8x1xf32> to vector<8x8xf32>
    %90 = arith.subf %86, %89 : vector<8x8xf32>
    %91 = math.exp %90 : vector<8x8xf32>
    %cst_54 = arith.constant dense<0.000000e+00> : vector<8xf32>
    %92 = vector.multi_reduction <add>, %91, %cst_54 [1] : vector<8x8xf32> to vector<8xf32>
    %93 = vector.shape_cast %92 : vector<8xf32> to vector<8x1xf32>
    %94 = tpu.reciprocal %93 {approx = true} : vector<8x1xf32> -> vector<8x1xf32>
    %95 = vector.broadcast %94 : vector<8x1xf32> to vector<8x8xf32>
    %96 = arith.mulf %91, %95 : vector<8x8xf32>
    %97 = arith.truncf %96 : vector<8x8xf32> to vector<8x8xbf16>
    %c0_55 = arith.constant 0 : index
    %c3_56 = arith.constant 3 : index
    %c0_57 = arith.constant 0 : index
    %c0_58 = arith.constant 0 : index
    %98 = vector.load %arg9[%c0_55, %c3_56, %c0_57, %c0_58] : memref<1x4x8x8xbf16, #tpu.memory_space<vmem>>, vector<1x1x8x8xbf16>
    %99 = vector.shape_cast %98 : vector<1x1x8x8xbf16> to vector<8x8xbf16>
    %100 = vector.shape_cast %97 : vector<8x8xbf16> to vector<1x1x8x8xbf16>
    tpu.vector_store %arg9[%c0_55, %c3_56, %c0_57, %c0_58], %100 {strides = array<i32>} : memref<1x4x8x8xbf16, #tpu.memory_space<vmem>>, vector<1x1x8x8xbf16>,
    %101 = arith.truncf %96 : vector<8x8xf32> to vector<8x8xbf16>
    %cst_59 = arith.constant dense<0.000000e+00> : vector<8x8xf32>
    %102 = tpu.matmul %101, %85, %cst_59 {dimension_numbers = #tpu.dot_dimension_numbers<[1], [0], [0], [1], [0, 0, 1, 1], [], []>} : vector<8x8xbf16>, vector<8x8xbf16>, vector<8x8xf32> -> vector<8x8xf32>
    %103 = arith.truncf %102 : vector<8x8xf32> to vector<8x8xbf16>
    %c0_60 = arith.constant 0 : index
    %c24_61 = arith.constant 24 : index
    %104 = vector.load %arg12[%c0_60, %c24_61] : memref<8x32xbf16, #tpu.memory_space<vmem>>, vector<8x8xbf16>
    tpu.vector_store %arg12[%c0_60, %c24_61], %103 {strides = array<i32>} : memref<8x32xbf16, #tpu.memory_space<vmem>>, vector<8x8xbf16>,
    %c0_62 = arith.constant 0 : index
    %c0_63 = arith.constant 0 : index
    %105 = vector.load %arg12[%c0_62, %c0_63] : memref<8x32xbf16, #tpu.memory_space<vmem>>, vector<8x32xbf16>
    %c0_64 = arith.constant 0 : index
    %c0_65 = arith.constant 0 : index
    %106 = vector.load %arg6[%c0_64, %c0_65] : memref<32x32xbf16, #tpu.memory_space<vmem>>, vector<32x32xbf16>
    %cst_66 = arith.constant dense<0.000000e+00> : vector<8x32xf32>
    %107 = tpu.matmul %105, %106, %cst_66 {dimension_numbers = #tpu.dot_dimension_numbers<[1], [0], [0], [1], [0, 0, 1, 1], [], []>} : vector<8x32xbf16>, vector<32x32xbf16>, vector<8x32xf32> -> vector<8x32xf32>
    %108 = vector.broadcast %3 : vector<1x32xf32> to vector<8x32xf32>
    %109 = arith.addf %107, %108 : vector<8x32xf32>
    %c0_67 = arith.constant 0 : index
    %c0_68 = arith.constant 0 : index
    %c0_69 = arith.constant 0 : index
    %110 = vector.load %arg8[%c0_67, %c0_68, %c0_69] : memref<1x8x32xf32, #tpu.memory_space<vmem>>, vector<1x8x32xf32>
    %111 = vector.shape_cast %110 : vector<1x8x32xf32> to vector<8x32xf32>
    %112 = vector.shape_cast %109 : vector<8x32xf32> to vector<1x8x32xf32>
    tpu.vector_store %arg8[%c0_67, %c0_68, %c0_69], %112 {strides = array<i32>} : memref<1x8x32xf32, #tpu.memory_space<vmem>>, vector<1x8x32xf32>,
    return
  }
  func.func @transform_0(%arg0: i32, %arg1: i32) -> (i32, i32, i32) {
    %c0_i32 = arith.constant 0 : i32
    %c0_i32_0 = arith.constant 0 : i32
    %c0_i32_1 = arith.constant 0 : i32
    return %arg0, %c0_i32, %c0_i32_0 : i32, i32, i32
  }
  func.func @transform_1(%arg0: i32, %arg1: i32) -> (i32, i32) {
    %c0_i32 = arith.constant 0 : i32
    %c0_i32_0 = arith.constant 0 : i32
    %c0_i32_1 = arith.constant 0 : i32
    return %c0_i32, %c0_i32_0 : i32, i32
  }
  func.func @transform_2(%arg0: i32, %arg1: i32) -> (i32, i32) {
    %c0_i32 = arith.constant 0 : i32
    %c0_i32_0 = arith.constant 0 : i32
    %c0_i32_1 = arith.constant 0 : i32
    return %c0_i32, %c0_i32_0 : i32, i32
  }
  func.func @transform_3(%arg0: i32, %arg1: i32) -> (i32, i32) {
    %c0_i32 = arith.constant 0 : i32
    %c0_i32_0 = arith.constant 0 : i32
    %c0_i32_1 = arith.constant 0 : i32
    return %c0_i32, %c0_i32_0 : i32, i32
  }
  func.func @transform_4(%arg0: i32, %arg1: i32) -> (i32, i32) {
    %c0_i32 = arith.constant 0 : i32
    %c0_i32_0 = arith.constant 0 : i32
    %c0_i32_1 = arith.constant 0 : i32
    return %c0_i32, %c0_i32_0 : i32, i32
  }
  func.func @transform_5(%arg0: i32, %arg1: i32) -> (i32, i32) {
    %c0_i32 = arith.constant 0 : i32
    %c0_i32_0 = arith.constant 0 : i32
    %c0_i32_1 = arith.constant 0 : i32
    return %c0_i32, %c0_i32_0 : i32, i32
  }
  func.func @transform_6(%arg0: i32, %arg1: i32) -> (i32, i32, i32) {
    %c0_i32 = arith.constant 0 : i32
    %c0_i32_0 = arith.constant 0 : i32
    return %arg0, %arg1, %c0_i32 : i32, i32, i32
  }
  func.func @transform_7(%arg0: i32, %arg1: i32) -> (i32, i32, i32, i32) {
    %c0_i32 = arith.constant 0 : i32
    %c0_i32_0 = arith.constant 0 : i32
    %c0_i32_1 = arith.constant 0 : i32
    return %arg0, %c0_i32, %arg1, %c0_i32_0 : i32, i32, i32, i32
  }
}

</mosaic_0001>

<llo_original>
// kernel: tpu_custom_call.1
$region0: #{tpu_custom_call.1}
  #allocation0 [shape = 'u32[]', space=smem, size = 0x4, offset = 0x4, fixed_abs, tag = 'smem constant byte address 0x4 - core index']
  #allocation1 [shape = 'u32[72,128]{1,0:T(1,128)}', space=vmem, size = 0x9000, scoped, tag = 'internal scratch']
  #allocation2 [shape = 'bf16[8,32]{1,0:T(8,128)(2,1)}', space=vmem, size = 0x800, scoped, tag = 'scratch operand']
  #allocation3 [shape = 'bf16[8,32]{1,0:T(8,128)(2,1)}', space=vmem, size = 0x800, scoped, tag = 'scratch operand']
  #allocation4 [shape = 'bf16[8,32]{1,0:T(8,128)(2,1)}', space=vmem, size = 0x800, scoped, tag = 'scratch operand']
  %s0 = inlined_call_operand.hbm [shape: bf16[2,8,32], index: 0, kind: input, shape index: {}]
  %s1 = inlined_call_operand.hbm [shape: bf16[32,32], index: 1, kind: input, shape index: {}]
  %s2 = inlined_call_operand.hbm [shape: bf16[32,32], index: 2, kind: input, shape index: {}]
  %s3 = inlined_call_operand.hbm [shape: bf16[32,32], index: 3, kind: input, shape index: {}]
  %s4 = inlined_call_operand.hbm [shape: bf16[32,32], index: 4, kind: input, shape index: {}]
  %s5 = inlined_call_operand.vmem [shape: f32[4,32], index: 5, kind: input, shape index: {}]
  %s6 = inlined_call_operand.hbm [shape: f32[2,8,32], index: 6, kind: output, shape index: {0}]
  %s7 = inlined_call_operand.hbm [shape: bf16[2,4,8,8], index: 7, kind: output, shape index: {1}]
  %8 = xla_tuple %s6, %s7
  %s9 = sld [smem:[#allocation0]]
  $region89: #{tpu_custom_call.1} parent=0
    _
  %s11 = ssub.s32 1, %s9
  %s12 = scalar_select 0, %s11, %s9
  $region1: #{tpu_custom_call.1} parent=0
    #allocation5 [shape = 'u8[4096]{0}', space=vmem, size = 0x1000, scoped, tag = 'input window, operand 0']
    #allocation6 [shape = 's32[2]{0}', space=sflag, size = 0x8, scoped, tag = 'scoped memory for tpu_custom_call.1']
    #allocation7 [shape = 's32[2]{0}', space=sflag, size = 0x8, scoped, tag = 'scoped memory for tpu_custom_call.1']
    #allocation8 [shape = 'u8[8192]{0}', space=vmem, size = 0x2000, scoped, tag = 'input window, operand 1, single buffered']
    #allocation9 [shape = 's32[1]{0}', space=sflag, size = 0x4, scoped, tag = 'scoped memory for tpu_custom_call.1']
    #allocation10 [shape = 'u8[8192]{0}', space=vmem, size = 0x2000, scoped, tag = 'input window, operand 2, single buffered']
    #allocation11 [shape = 'u8[8192]{0}', space=vmem, size = 0x2000, scoped, tag = 'input window, operand 3, single buffered']
    #allocation12 [shape = 's32[1]{0}', space=sflag, size = 0x4, scoped, tag = 'scoped memory for tpu_custom_call.1']
    #allocation13 [shape = 'u8[8192]{0}', space=vmem, size = 0x2000, scoped, tag = 'input window, operand 4, single buffered']
    #allocation14 [shape = 'u8[8192]{0}', space=vmem, size = 0x2000, scoped, tag = 'output window, operand 0']
    #allocation15 [shape = 'u8[16384]{0}', space=vmem, size = 0x4000, scoped, tag = 'output window, operand 1']
    #allocation16 [shape = 's32[2]{0}', space=sflag, size = 0x8, scoped, tag = 'scoped memory for tpu_custom_call.1']
    %13 = vsyncpa [#allocation6], 0
    %s14 = scalar_lea.sflag [#allocation6], 1
    %15 = vsyncpa %s14, 0
    %16 = vsyncpa [#allocation9], 0
    %17 = vsyncpa [#allocation12], 0
    %18 = vsyncpa [#allocation7], 0
    %s19 = scalar_lea.sflag [#allocation7], 1
    %20 = vsyncpa %s19, 0
    %21 = vsyncpa [#allocation16], 0
    %s22 = scalar_lea.sflag [#allocation16], 1
    %23 = vsyncpa %s22, 0
    loop: start=0, step=1, limit=4
    $region2: #{tpu_custom_call.1} parent=1 // loop_pre_header
      _
    $region3: #{tpu_custom_call.1} parent=1 // loop_header
      %s25 = sphi 0, %s29
      %p26 = scmp.ge.s32.totalorder %s25, 4
      %s32 = sphi 0, %s44
      %s33 = sphi 0, %s40
      %s34 = sphi 0, %s32
      %s35 = sphi 0, %s33
      %s36 = sphi 0, %s34
      %s37 = sphi 0, %s35
      %s47 = sphi 0, %s49
      %s50 = sphi 0, %s47
      %s51 = sphi 0, %s50
      %s67 = sphi 0, %s51
      %s71 = sphi 0, %s71
      %s73 = sphi 0, %s71
      %s74 = sphi 0, %s73
      %s88 = sphi 0, %s74
      %s92 = sphi 0, %s92
      %s94 = sphi 0, %s92
      %s95 = sphi 0, %s94
      %s109 = sphi 0, %s95
      %s113 = sphi 0, %s113
      %s115 = sphi 0, %s113
      %s116 = sphi 0, %s115
      %s130 = sphi 0, %s116
      %s134 = sphi 0, %s134
      %s136 = sphi 0, %s134
      %s137 = sphi 0, %s136
      %s151 = sphi 0, %s137
      %s155 = sphi 0, %s155
      %s157 = sphi 0, %s155
      %s158 = sphi 0, %s157
      %s172 = sphi 0, %s158
      %s180 = sphi 0, %s182
      %s183 = sphi 0, %s180
      %s184 = sphi 0, %s183
      %s200 = sphi 0, %s184
      %s208 = sphi 0, %s210
      %s211 = sphi 0, %s208
      %s212 = sphi 0, %s211
      %s228 = sphi 0, %s212
    $region4: #{tpu_custom_call.1} parent=1 // loop_header_branch
      %28 = sbr.rel (%p26) target = $region8
    $region5: #{tpu_custom_call.1} parent=1 // loop_body
      %s30 = ssub.s32 %s25, 1
      %s31 = ssub.s32 %s25, 2
      %s38 = sadd.s32 1, %s33
      %p39 = scmp.ge.s32.totalorder %s38, 1
      %s40 = scalar_select %p39, 0, %s38
      %s41 = sadd.s32 1, %s32
      %s42 = scalar_select %p39, %s41, %s32
      %p43 = scmp.ge.s32.totalorder %s42, 2
      %s44 = scalar_select %p43, 0, %s42
      %s45 = ssub.s32 %s32, %s44
      %p46 = scmp.eq.s32.totalorder %s45, 0
      %s48 = sadd.s32 %s47, 1
      %s49 = scalar_select %p46, %s47, %s48
      %p52 = pneg %p46
      %p53 = scmp.eq.s32.totalorder %s25, 1
      %p54 = por %p52, %p53
      %p55 = scmp.ne.s32.totalorder %s47, %s50
      %p56 = scmp.eq.s32.totalorder %s25, 0
      %p57 = por %p55, %p56
      %p58 = scmp.ne.s32.totalorder %s47, %s50
      %p59 = scmp.eq.s32.totalorder %s30, 1
      %p60 = por %p58, %p59
      %p61 = scmp.ne.s32.totalorder %s50, %s51
      %p62 = scmp.eq.s32.totalorder %s30, 0
      %p63 = por %p61, %p62
      %p64 = scmp.ne.s32.totalorder %s50, %s51
      %p65 = scmp.eq.s32.totalorder %s31, 1
      %p66 = por %p64, %p65
      %p68 = scmp.ne.s32.totalorder %s51, %s67
      %p69 = scmp.eq.s32.totalorder %s31, 0
      %p70 = por %p68, %p69
      %s72 = sadd.s32 %s71, 1
      %p75 = scmp.eq.s32.totalorder %s25, 1
      %p76 = scmp.ne.s32.totalorder %s71, %s73
      %p77 = scmp.eq.s32.totalorder %s25, 0
      %p78 = por %p76, %p77
      %p79 = scmp.ne.s32.totalorder %s71, %s73
      %p80 = scmp.eq.s32.totalorder %s30, 1
      %p81 = por %p79, %p80
      %p82 = scmp.ne.s32.totalorder %s73, %s74
      %p83 = scmp.eq.s32.totalorder %s30, 0
      %p84 = por %p82, %p83
      %p85 = scmp.ne.s32.totalorder %s73, %s74
      %p86 = scmp.eq.s32.totalorder %s31, 1
      %p87 = por %p85, %p86
      %p89 = scmp.ne.s32.totalorder %s74, %s88
      %p90 = scmp.eq.s32.totalorder %s31, 0
      %p91 = por %p89, %p90
      %s93 = sadd.s32 %s92, 1
      %p96 = scmp.eq.s32.totalorder %s25, 1
      %p97 = scmp.ne.s32.totalorder %s92, %s94
      %p98 = scmp.eq.s32.totalorder %s25, 0
      %p99 = por %p97, %p98
      %p100 = scmp.ne.s32.totalorder %s92, %s94
      %p101 = scmp.eq.s32.totalorder %s30, 1
      %p102 = por %p100, %p101
      %p103 = scmp.ne.s32.totalorder %s94, %s95
      %p104 = scmp.eq.s32.totalorder %s30, 0
      %p105 = por %p103, %p104
      %p106 = scmp.ne.s32.totalorder %s94, %s95
      %p107 = scmp.eq.s32.totalorder %s31, 1
      %p108 = por %p106, %p107
      %p110 = scmp.ne.s32.totalorder %s95, %s109
      %p111 = scmp.eq.s32.totalorder %s31, 0
      %p112 = por %p110, %p111
      %s114 = sadd.s32 %s113, 1
      %p117 = scmp.eq.s32.totalorder %s25, 1
      %p118 = scmp.ne.s32.totalorder %s113, %s115
      %p119 = scmp.eq.s32.totalorder %s25, 0
      %p120 = por %p118, %p119
      %p121 = scmp.ne.s32.totalorder %s113, %s115
      %p122 = scmp.eq.s32.totalorder %s30, 1
      %p123 = por %p121, %p122
      %p124 = scmp.ne.s32.totalorder %s115, %s116
      %p125 = scmp.eq.s32.totalorder %s30, 0
      %p126 = por %p124, %p125
      %p127 = scmp.ne.s32.totalorder %s115, %s116
      %p128 = scmp.eq.s32.totalorder %s31, 1
      %p129 = por %p127, %p128
      %p131 = scmp.ne.s32.totalorder %s116, %s130
      %p132 = scmp.eq.s32.totalorder %s31, 0
      %p133 = por %p131, %p132
      %s135 = sadd.s32 %s134, 1
      %p138 = scmp.eq.s32.totalorder %s25, 1
      %p139 = scmp.ne.s32.totalorder %s134, %s136
      %p140 = scmp.eq.s32.totalorder %s25, 0
      %p141 = por %p139, %p140
      %p142 = scmp.ne.s32.totalorder %s134, %s136
      %p143 = scmp.eq.s32.totalorder %s30, 1
      %p144 = por %p142, %p143
      %p145 = scmp.ne.s32.totalorder %s136, %s137
      %p146 = scmp.eq.s32.totalorder %s30, 0
      %p147 = por %p145, %p146
      %p148 = scmp.ne.s32.totalorder %s136, %s137
      %p149 = scmp.eq.s32.totalorder %s31, 1
      %p150 = por %p148, %p149
      %p152 = scmp.ne.s32.totalorder %s137, %s151
      %p153 = scmp.eq.s32.totalorder %s31, 0
      %p154 = por %p152, %p153
      %s156 = sadd.s32 %s155, 1
      %p159 = scmp.eq.s32.totalorder %s25, 1
      %p160 = scmp.ne.s32.totalorder %s155, %s157
      %p161 = scmp.eq.s32.totalorder %s25, 0
      %p162 = por %p160, %p161
      %p163 = scmp.ne.s32.totalorder %s155, %s157
      %p164 = scmp.eq.s32.totalorder %s30, 1
      %p165 = por %p163, %p164
      %p166 = scmp.ne.s32.totalorder %s157, %s158
      %p167 = scmp.eq.s32.totalorder %s30, 0
      %p168 = por %p166, %p167
      %p169 = scmp.ne.s32.totalorder %s157, %s158
      %p170 = scmp.eq.s32.totalorder %s31, 1
      %p171 = por %p169, %p170
      %p173 = scmp.ne.s32.totalorder %s158, %s172
      %p174 = scmp.eq.s32.totalorder %s31, 0
      %p175 = por %p173, %p174
      %s176 = ssub.s32 %s32, %s44
      %s177 = ssub.s32 %s33, %s40
      %s178 = sor.u32 %s176, %s177
      %p179 = scmp.eq.s32.totalorder %s178, 0
      %s181 = sadd.s32 %s180, 1
      %s182 = scalar_select %p179, %s180, %s181
      %p185 = pneg %p179
      %p186 = scmp.eq.s32.totalorder %s25, 1
      %p187 = por %p185, %p186
      %p188 = scmp.ne.s32.totalorder %s180, %s183
      %p189 = scmp.eq.s32.totalorder %s25, 0
      %p190 = por %p188, %p189
      %p191 = scmp.ne.s32.totalorder %s180, %s183
      %p192 = scmp.eq.s32.totalorder %s30, 1
      %p193 = por %p191, %p192
      %p194 = scmp.ne.s32.totalorder %s183, %s184
      %p195 = scmp.eq.s32.totalorder %s30, 0
      %p196 = por %p194, %p195
      %p197 = scmp.ne.s32.totalorder %s183, %s184
      %p198 = scmp.eq.s32.totalorder %s31, 1
      %p199 = por %p197, %p198
      %p201 = scmp.ne.s32.totalorder %s184, %s200
      %p202 = scmp.eq.s32.totalorder %s31, 0
      %p203 = por %p201, %p202
      %s204 = ssub.s32 %s32, %s44
      %s205 = ssub.s32 %s33, %s40
      %s206 = sor.u32 %s204, %s205
      %p207 = scmp.eq.s32.totalorder %s206, 0
      %s209 = sadd.s32 %s208, 1
      %s210 = scalar_select %p207, %s208, %s209
      %p213 = pneg %p207
      %p214 = scmp.eq.s32.totalorder %s25, 1
      %p215 = por %p213, %p214
      %p216 = scmp.ne.s32.totalorder %s208, %s211
      %p217 = scmp.eq.s32.totalorder %s25, 0
      %p218 = por %p216, %p217
      %p219 = scmp.ne.s32.totalorder %s208, %s211
      %p220 = scmp.eq.s32.totalorder %s30, 1
      %p221 = por %p219, %p220
      %p222 = scmp.ne.s32.totalorder %s211, %s212
      %p223 = scmp.eq.s32.totalorder %s30, 0
      %p224 = por %p222, %p223
      %p225 = scmp.ne.s32.totalorder %s211, %s212
      %p226 = scmp.eq.s32.totalorder %s31, 1
      %p227 = por %p225, %p226
      %p229 = scmp.ne.s32.totalorder %s212, %s228
      %p230 = scmp.eq.s32.totalorder %s31, 0
      %p231 = por %p229, %p230
      %p232 = scmp.le.s32.totalorder 1, %s25
      %p233 = scmp.lt.s32.totalorder %s25, 3
      %p234 = pnand %p232, %p233
      %p235 = pneg %p234
      // Predicated region
      $region9: #{tpu_custom_call.1} parent=5 // pred_check
        _
      $region10: #{tpu_custom_call.1} parent=5 // pred_check_branch
        %237 = sbr.rel (%p234) target = $region12
      $region11: #{tpu_custom_call.1} parent=5 // pred_region
        %s238 = ssub.s32 %s25, 1
        // Predicated region
        $region13: #{tpu_custom_call.1} parent=11 // pred_check
          %p239 = pneg %p84
        $region14: #{tpu_custom_call.1} parent=11 // pred_check_branch
          %241 = sbr.rel (%p239) target = $region16
        $region15: #{tpu_custom_call.1} parent=11 // pred_region
          %243 = vsyncadd [#allocation9], 0
          %s244 = sshll.u32 %s1, 4
          %s245 = int_to_ptr.hbm [resolvable:$true] %s244
          %s246 = sshll.u32 [#allocation8], 4
          %s247 = int_to_ptr.vmem [resolvable:$true] %s246
          %252 = dma.hbm_to_vmem [thread:$0]  %s245, 256, %s247, [#allocation9], 64, 64, 4
        $region16: #{tpu_custom_call.1} parent=11 // pred_fallthru
          _
        // Predicated region
        $region17: #{tpu_custom_call.1} parent=11 // pred_check
          %p253 = pneg %p105
        $region18: #{tpu_custom_call.1} parent=11 // pred_check_branch
          %255 = sbr.rel (%p253) target = $region20
        $region19: #{tpu_custom_call.1} parent=11 // pred_region
          %257 = vsyncadd [#allocation9], 0
          %s258 = sshll.u32 %s2, 4
          %s259 = int_to_ptr.hbm [resolvable:$true] %s258
          %s260 = sshll.u32 [#allocation10], 4
          %s261 = int_to_ptr.vmem [resolvable:$true] %s260
          %266 = dma.hbm_to_vmem [thread:$0]  %s259, 256, %s261, [#allocation9], 64, 64, 4
        $region20: #{tpu_custom_call.1} parent=11 // pred_fallthru
          _
        // Predicated region
        $region21: #{tpu_custom_call.1} parent=11 // pred_check
          %p267 = pneg %p126
        $region22: #{tpu_custom_call.1} parent=11 // pred_check_branch
          %269 = sbr.rel (%p267) target = $region24
        $region23: #{tpu_custom_call.1} parent=11 // pred_region
          %271 = vsyncadd [#allocation12], 0
          %s272 = sshll.u32 %s3, 4
          %s273 = int_to_ptr.hbm [resolvable:$true] %s272
          %s274 = sshll.u32 [#allocation11], 4
          %s275 = int_to_ptr.vmem [resolvable:$true] %s274
          %280 = dma.hbm_to_vmem [thread:$0]  %s273, 256, %s275, [#allocation12], 64, 64, 4
        $region24: #{tpu_custom_call.1} parent=11 // pred_fallthru
          _
        // Predicated region
        $region25: #{tpu_custom_call.1} parent=11 // pred_check
          %p281 = pneg %p147
        $region26: #{tpu_custom_call.1} parent=11 // pred_check_branch
          %283 = sbr.rel (%p281) target = $region28
        $region27: #{tpu_custom_call.1} parent=11 // pred_region
          %285 = vsyncadd [#allocation12], 0
          %s286 = sshll.u32 %s4, 4
          %s287 = int_to_ptr.hbm [resolvable:$true] %s286
          %s288 = sshll.u32 [#allocation13], 4
          %s289 = int_to_ptr.vmem [resolvable:$true] %s288
          %294 = dma.hbm_to_vmem [thread:$0]  %s287, 256, %s289, [#allocation12], 64, 64, 4
        $region28: #{tpu_custom_call.1} parent=11 // pred_fallthru
          _
        // Predicated region
        $region29: #{tpu_custom_call.1} parent=11 // pred_check
          %p295 = pneg %p168
        $region30: #{tpu_custom_call.1} parent=11 // pred_check_branch
          %297 = sbr.rel (%p295) target = $region32
        $region31: #{tpu_custom_call.1} parent=11 // pred_region
          _
        $region32: #{tpu_custom_call.1} parent=11 // pred_fallthru
          _
      $region12: #{tpu_custom_call.1} parent=5 // pred_fallthru
        _
      %p298 = scmp.lt.s32.totalorder %s25, 2
      // Predicated region
      $region33: #{tpu_custom_call.1} parent=5 // pred_check
        %p299 = pneg %p298
      $region34: #{tpu_custom_call.1} parent=5 // pred_check_branch
        %301 = sbr.rel (%p299) target = $region36
      $region35: #{tpu_custom_call.1} parent=5 // pred_region
        // Predicated region
        $region37: #{tpu_custom_call.1} parent=35 // pred_check
          %p302 = pneg %p57
        $region38: #{tpu_custom_call.1} parent=35 // pred_check_branch
          %304 = sbr.rel (%p302) target = $region40
        $region39: #{tpu_custom_call.1} parent=35 // pred_region
          %s305 = sand.u32 %s47, 1
          %s306 = scalar_lea.sflag [#allocation6], %s305
          %s307 = sand.u32 %s47, 1
          %s308 = smul.addr %s307, 4
          %s309 = scalar_lea.vmem [#allocation5], %s308
          %311 = vsyncadd %s306, 0
          %s312 = smul.addr %s32, 4
          %s313 = scalar_lea.hbm %s0, %s312
          %s315 = sshll.u32 %s313, 4
          %s316 = int_to_ptr.hbm [resolvable:$true] %s315
          %s317 = sshll.u32 %s309, 4
          %s318 = int_to_ptr.vmem [resolvable:$true] %s317
          %320 = dma.hbm_to_vmem [thread:$0]  %s316, 64, %s318, %s306
        $region40: #{tpu_custom_call.1} parent=35 // pred_fallthru
          _
      $region36: #{tpu_custom_call.1} parent=5 // pred_fallthru
        _
      %p321 = scmp.le.s32.totalorder 1, %s25
      %p322 = scmp.lt.s32.totalorder %s25, 3
      %p323 = pnand %p321, %p322
      %p324 = pneg %p323
      // Predicated region
      $region41: #{tpu_custom_call.1} parent=5 // pred_check
        _
      $region42: #{tpu_custom_call.1} parent=5 // pred_check_branch
        %326 = sbr.rel (%p323) target = $region44
      $region43: #{tpu_custom_call.1} parent=5 // pred_region
        %s327 = ssub.s32 %s25, 1
        %s328 = sand.u32 %s50, 1
        %s329 = scalar_lea.sflag [#allocation6], %s328
        %s330 = sand.u32 %s50, 1
        %s331 = smul.addr %s330, 4
        %s332 = scalar_lea.vmem [#allocation5], %s331
        // Predicated region
        $region45: #{tpu_custom_call.1} parent=43 // pred_check
          %p333 = pneg %p63
        $region46: #{tpu_custom_call.1} parent=43 // pred_check_branch
          %335 = sbr.rel (%p333) target = $region48
        $region47: #{tpu_custom_call.1} parent=43 // pred_region
          %337 = dma.done %s329, 64
        $region48: #{tpu_custom_call.1} parent=43 // pred_fallthru
          _
        // Predicated region
        $region49: #{tpu_custom_call.1} parent=43 // pred_check
          %p338 = pneg %p84
        $region50: #{tpu_custom_call.1} parent=43 // pred_check_branch
          %340 = sbr.rel (%p338) target = $region52
        $region51: #{tpu_custom_call.1} parent=43 // pred_region
          %342 = dma.done [#allocation9], 256
        $region52: #{tpu_custom_call.1} parent=43 // pred_fallthru
          _
        // Predicated region
        $region53: #{tpu_custom_call.1} parent=43 // pred_check
          %p343 = pneg %p105
        $region54: #{tpu_custom_call.1} parent=43 // pred_check_branch
          %345 = sbr.rel (%p343) target = $region56
        $region55: #{tpu_custom_call.1} parent=43 // pred_region
          %347 = dma.done [#allocation9], 256
        $region56: #{tpu_custom_call.1} parent=43 // pred_fallthru
          _
        // Predicated region
        $region57: #{tpu_custom_call.1} parent=43 // pred_check
          %p348 = pneg %p126
        $region58: #{tpu_custom_call.1} parent=43 // pred_check_branch
          %350 = sbr.rel (%p348) target = $region60
        $region59: #{tpu_custom_call.1} parent=43 // pred_region
          %352 = dma.done [#allocation12], 256
        $region60: #{tpu_custom_call.1} parent=43 // pred_fallthru
          _
        // Predicated region
        $region61: #{tpu_custom_call.1} parent=43 // pred_check
          %p353 = pneg %p147
        $region62: #{tpu_custom_call.1} parent=43 // pred_check_branch
          %355 = sbr.rel (%p353) target = $region64
        $region63: #{tpu_custom_call.1} parent=43 // pred_region
          %357 = dma.done [#allocation12], 256
        $region64: #{tpu_custom_call.1} parent=43 // pred_fallthru
          _
        %s358 = sand.u32 %s50, 1
        %s359 = scalar_lea.sflag [#allocation6], %s358
        %s360 = sand.u32 %s50, 1
        %s361 = smul.addr %s360, 4
        %s362 = scalar_lea.vmem [#allocation5], %s361
        %p363 = pneg %p63
        %p364 = pneg %p60
        %p365 = pneg %p84
        %p366 = pneg %p81
        %p367 = pneg %p105
        %p368 = pneg %p102
        %p369 = pneg %p126
        %p370 = pneg %p123
        %p371 = pneg %p147
        %p372 = pneg %p144
        %p373 = pneg %p168
        %p374 = pneg %p165
        %p375 = pneg %p196
        %p376 = pneg %p193
        %s377 = sand.u32 %s183, 1
        %s378 = scalar_lea.sflag [#allocation7], %s377
        %s379 = sand.u32 %s183, 1
        %s380 = smul.addr %s379, 8
        %s381 = scalar_lea.vmem [#allocation14], %s380
        %p382 = pneg %p224
        %p383 = pneg %p221
        %s384 = sand.u32 %s211, 1
        %s385 = scalar_lea.sflag [#allocation16], %s384
        %s386 = sand.u32 %s211, 1
        %s387 = smul.addr %s386, 16
        %s388 = scalar_lea.vmem [#allocation15], %s387
        %v390 = vld [vmem:[%s5] sm:$0x1]
        %v391 = vld [vmem:[%s5 + $0x1] sm:$0x1]
        %v392 = vld [vmem:[%s5 + $0x2] sm:$0x1]
        %v393 = vld [vmem:[%s5 + $0x3] sm:$0x1]
        %p394 = scmp.eq.s32.totalorder %s35, 0
        // Predicated region
        $region65: #{tpu_custom_call.1} parent=43 // pred_check
          %p395 = pneg %p394
        $region66: #{tpu_custom_call.1} parent=43 // pred_check_branch
          %397 = sbr.rel (%p395) target = $region68
        $region67: #{tpu_custom_call.1} parent=43 // pred_region
          %v398 = vld [vmem:[%s332] sm:$0xf]
          %v399 = vld [vmem:[#allocation10] sm:$0xf]
          %v400 = vld [vmem:[#allocation10 + $0x4] sm:$0xf]
          %v401 = vld [vmem:[#allocation10 + $0x8] sm:$0xf]
          %v402 = vld [vmem:[#allocation10 + $0xc] sm:$0xf]
          %v403 = vperm.slane %v391, 0
          %v408 = vunpack.c.l.b16 %v399
          %v409 = vunpack.c.l.b16 %v400
          %v410 = vunpack.c.l.b16 %v401
          %v411 = vunpack.c.l.b16 %v402
          %v412 = vpack.c.b16 %v409, %v408
          %v413 = vpack.c.b16 %v411, %v410
          %vm416 = vcmask 261120
          %v418 = vsel %vm416, %v398, 0
          %420 = vmatpush.bf16.msra.mxu0 0
          %421 = vmatpush.bf16.msra.mxu0 0
          %422 = vmatpush.bf16.msra.mxu0 0
          %423 = vmatpush.bf16.msra.mxu0 0
          %424 = vmatpush.bf16.msra.mxu0 0
          %425 = vmatpush.bf16.msra.mxu0 0
          %426 = vmatpush.bf16.msra.mxu0 %v413
          %427 = vmatpush.bf16.msra.mxu0 %v412
          %428 = vmatmul.bf16.gmra.mxu0 %v418
          %v429 = vpop.f32.mrf.mxu0
          %v430 = vadd.f32 %v403, %v429
          %v431 = vpop.f32.mrf.mxu0
          %432 = vdwg.mxu0
          %v433 = vld [vmem:[#allocation11] sm:$0xf]
          %v434 = vld [vmem:[#allocation11 + $0x4] sm:$0xf]
          %v435 = vld [vmem:[#allocation11 + $0x8] sm:$0xf]
          %v436 = vld [vmem:[#allocation11 + $0xc] sm:$0xf]
          %v437 = vperm.slane %v392, 0
          %v442 = vunpack.c.l.b16 %v433
          %v443 = vunpack.c.l.b16 %v434
          %v444 = vunpack.c.l.b16 %v435
          %v445 = vunpack.c.l.b16 %v436
          %v446 = vpack.c.b16 %v443, %v442
          %v447 = vpack.c.b16 %v445, %v444
          %450 = vmatpush.bf16.msra.mxu0 0
          %451 = vmatpush.bf16.msra.mxu0 0
          %452 = vmatpush.bf16.msra.mxu0 0
          %453 = vmatpush.bf16.msra.mxu0 0
          %454 = vmatpush.bf16.msra.mxu0 0
          %455 = vmatpush.bf16.msra.mxu0 0
          %456 = vmatpush.bf16.msra.mxu0 %v447
          %457 = vmatpush.bf16.msra.mxu0 %v446
          %458 = vmatmul.bf16.gmra.mxu0 %v418
          %v459 = vpop.f32.mrf.mxu0
          %v460 = vadd.f32 %v437, %v459
          %v461 = vpop.f32.mrf.mxu0
          %462 = vdwg.mxu0
          %v463 = vpack.c.bf16 %v430, %v430
          %vm464 = vcmask 257024
          %465 = vst.msk [vmem:[#allocation2] sm:$0xf] %vm464, %v463
          %v466 = vpack.c.bf16 %v460, %v460
          %467 = vst.msk [vmem:[#allocation3] sm:$0xf] %vm464, %v466
        $region68: #{tpu_custom_call.1} parent=43 // pred_fallthru
          _
        %s468 = smul.u32 %s35, 8
        %s469 = sshra.s32 %s468, 3
        %s470 = sand.u32 %s468, 7
        %s471 = smul.addr %s469, 4
        %s472 = scalar_lea.vmem %s332, %s471 [#allocation5]
        %v473 = vld [vmem:[%s472] sm:$0xf]
        %v474 = vld [vmem:[#allocation8] sm:$0xf]
        %v475 = vld [vmem:[#allocation8 + $0x4] sm:$0xf]
        %v476 = vld [vmem:[#allocation8 + $0x8] sm:$0xf]
        %v477 = vld [vmem:[#allocation8 + $0xc] sm:$0xf]
        %v478 = vperm.slane %v390, 0
        %v483 = vunpack.c.l.b16 %v474
        %v484 = vunpack.c.l.b16 %v475
        %v485 = vunpack.c.l.b16 %v476
        %v486 = vunpack.c.l.b16 %v477
        %v487 = vpack.c.b16 %v484, %v483
        %v488 = vpack.c.b16 %v486, %v485
        %vm491 = vcmask 261120
        %v493 = vsel %vm491, %v473, 0
        %495 = vmatpush.bf16.msra.mxu0 0
        %496 = vmatpush.bf16.msra.mxu0 0
        %497 = vmatpush.bf16.msra.mxu0 0
        %498 = vmatpush.bf16.msra.mxu0 0
        %499 = vmatpush.bf16.msra.mxu0 0
        %500 = vmatpush.bf16.msra.mxu0 0
        %501 = vmatpush.bf16.msra.mxu0 %v488
        %502 = vmatpush.bf16.msra.mxu0 %v487
        %503 = vmatmul.bf16.gmra.mxu0 %v493
        %v504 = vpop.f32.mrf.mxu0
        %v505 = vadd.f32 %v478, %v504
        %v506 = vpop.f32.mrf.mxu0
        %507 = vdwg.mxu0
        %v508 = vpack.c.bf16 %v505, %v505
        %v509 = vld [vmem:[#allocation2] sm:$0xf]
        %v510 = vld [vmem:[#allocation3] sm:$0xf]
        %vm511 = vcmask 64512
        %v513 = vsel %vm511, %v508, 0
        %v516 = vsel %vm511, %v509, 0
        %518 = vmatpush.bf16.xpose.msra.mxu0 0
        %519 = vmatpush.bf16.xpose.msra.mxu0 0
        %520 = vmatpush.bf16.xpose.msra.mxu0 0
        %521 = vmatpush.bf16.xpose.msra.mxu0 0
        %522 = vmatpush.bf16.xpose.msra.mxu0 0
        %523 = vmatpush.bf16.xpose.msra.mxu0 0
        %524 = vmatpush.bf16.xpose.msra.mxu0 0
        %525 = vmatpush.bf16.xpose.msra.mxu0 %v516
        %526 = vmatmul.bf16.gmra.mxu0 %v513
        %v527 = vpop.f32.mrf.mxu0
        %v528 = vadd.f32 0.0, %v527
        %v529 = vpop.f32.mrf.mxu0
        %530 = vdwg.mxu0
        %v531 = vsel %vm511, %v528, -inf
        %532 = vmax.xlane.f32.xlu0 %v531
        %v533 = vpop.xlane.xlu0 %532
        %v534 = vsub.f32 %v528, %v533
        %v535 = vmul.f32 %v534, 1.442695
        %v536 = vpow.pop %v535
        %v537 = vsel %vm511, %v536, 0.0
        %538 = vadd.xlane.f32.xlu0 %v537
        %v539 = vpop.xlane.xlu0 %538
        %v540 = vrcp.pop %v539
        %v541 = vmul.f32 %v536, %v540
        %v542 = vpack.c.bf16 %v541, %v541
        %vm543 = vcmask 60416
        %544 = vst.msk [vmem:[%s388] sm:$0xf] %vm543, %v542
        %v546 = vsel %vm511, %v542, 0
        %vm548 = vcmask 1043456
        %v550 = vsel %vm548, %v510, 0
        %552 = vmatpush.bf16.msra.mxu0 0
        %553 = vmatpush.bf16.msra.mxu0 0
        %554 = vmatpush.bf16.msra.mxu0 0
        %555 = vmatpush.bf16.msra.mxu0 0
        %556 = vmatpush.bf16.msra.mxu0 0
        %557 = vmatpush.bf16.msra.mxu0 0
        %558 = vmatpush.bf16.msra.mxu0 0
        %559 = vmatpush.bf16.msra.mxu0 %v550
        %560 = vmatmul.bf16.gmra.mxu0 %v546
        %v561 = vpop.f32.mrf.mxu0
        %v562 = vadd.f32 0.0, %v561
        %v563 = vpop.f32.mrf.mxu0
        %564 = vdwg.mxu0
        %v565 = vpack.c.bf16 %v562, %v562
        %566 = vst.msk [vmem:[#allocation4] sm:$0xf] %vm543, %v565
        %v567 = vld [vmem:[#allocation2] sm:$0xf]
        %v568 = vld [vmem:[#allocation3] sm:$0xf]
        %v570 = vunpack.c.l.b16 %v508
        %v571 = vpack.c.b16 %v570, %v570
        %572 = vrot.lane.b32.xlu0 %v571, 120
        %v573 = vpop.permute.xlu0 %572
        %v575 = vunpack.c.l.b16 %v567
        %v576 = vpack.c.b16 %v575, %v575
        %577 = vrot.lane.b32.xlu0 %v576, 120
        %v578 = vpop.permute.xlu0 %577
        %v580 = vsel %vm511, %v573, 0
        %v583 = vsel %vm511, %v578, 0
        %585 = vmatpush.bf16.xpose.msra.mxu0 0
        %586 = vmatpush.bf16.xpose.msra.mxu0 0
        %587 = vmatpush.bf16.xpose.msra.mxu0 0
        %588 = vmatpush.bf16.xpose.msra.mxu0 0
        %589 = vmatpush.bf16.xpose.msra.mxu0 0
        %590 = vmatpush.bf16.xpose.msra.mxu0 0
        %591 = vmatpush.bf16.xpose.msra.mxu0 0
        %592 = vmatpush.bf16.xpose.msra.mxu0 %v583
        %593 = vmatmul.bf16.gmra.mxu0 %v580
        %v594 = vpop.f32.mrf.mxu0
        %v595 = vadd.f32 0.0, %v594
        %v596 = vpop.f32.mrf.mxu0
        %597 = vdwg.mxu0
        %v598 = vsel %vm511, %v595, -inf
        %599 = vmax.xlane.f32.xlu0 %v598
        %v600 = vpop.xlane.xlu0 %599
        %v601 = vsub.f32 %v595, %v600
        %v602 = vmul.f32 %v601, 1.442695
        %v603 = vpow.pop %v602
        %v604 = vsel %vm511, %v603, 0.0
        %605 = vadd.xlane.f32.xlu0 %v604
        %v606 = vpop.xlane.xlu0 %605
        %v607 = vrcp.pop %v606
        %v608 = vmul.f32 %v603, %v607
        %v609 = vpack.c.bf16 %v608, %v608
        %s610 = scalar_lea.vmem %s388, 4 [#allocation15]
        %611 = vst.msk [vmem:[%s610] sm:$0xf] %vm543, %v609
        %v613 = vunpack.c.l.b16 %v568
        %v614 = vpack.c.b16 %v613, %v613
        %615 = vrot.lane.b32.xlu0 %v614, 120
        %v616 = vpop.permute.xlu0 %615
        %v618 = vsel %vm511, %v609, 0
        %v621 = vsel %vm548, %v616, 0
        %623 = vmatpush.bf16.msra.mxu0 0
        %624 = vmatpush.bf16.msra.mxu0 0
        %625 = vmatpush.bf16.msra.mxu0 0
        %626 = vmatpush.bf16.msra.mxu0 0
        %627 = vmatpush.bf16.msra.mxu0 0
        %628 = vmatpush.bf16.msra.mxu0 0
        %629 = vmatpush.bf16.msra.mxu0 0
        %630 = vmatpush.bf16.msra.mxu0 %v621
        %631 = vmatmul.bf16.gmra.mxu0 %v618
        %v632 = vpop.f32.mrf.mxu0
        %v633 = vadd.f32 0.0, %v632
        %v634 = vpop.f32.mrf.mxu0
        %635 = vdwg.mxu0
        %v636 = vpack.c.bf16 %v633, %v633
        %638 = vrot.lane.b32.xlu0 %v636, 8
        %v639 = vpop.permute.xlu0 %638
        %vm641 = vcmask 126016
        %642 = vst.msk [vmem:[#allocation4] sm:$0xf] %vm641, %v639
        %v643 = vld [vmem:[#allocation2] sm:$0xf]
        %v644 = vld [vmem:[#allocation3] sm:$0xf]
        %645 = vrot.lane.b32.xlu0 %v571, 112
        %v646 = vpop.permute.xlu0 %645
        %v648 = vunpack.c.l.b16 %v643
        %v649 = vpack.c.b16 %v648, %v648
        %650 = vrot.lane.b32.xlu0 %v649, 112
        %v651 = vpop.permute.xlu0 %650
        %v653 = vsel %vm511, %v646, 0
        %v656 = vsel %vm511, %v651, 0
        %658 = vmatpush.bf16.xpose.msra.mxu0 0
        %659 = vmatpush.bf16.xpose.msra.mxu0 0
        %660 = vmatpush.bf16.xpose.msra.mxu0 0
        %661 = vmatpush.bf16.xpose.msra.mxu0 0
        %662 = vmatpush.bf16.xpose.msra.mxu0 0
        %663 = vmatpush.bf16.xpose.msra.mxu0 0
        %664 = vmatpush.bf16.xpose.msra.mxu0 0
        %665 = vmatpush.bf16.xpose.msra.mxu0 %v656
        %666 = vmatmul.bf16.gmra.mxu0 %v653
        %v667 = vpop.f32.mrf.mxu0
        %v668 = vadd.f32 0.0, %v667
        %v669 = vpop.f32.mrf.mxu0
        %670 = vdwg.mxu0
        %v671 = vsel %vm511, %v668, -inf
        %672 = vmax.xlane.f32.xlu0 %v671
        %v673 = vpop.xlane.xlu0 %672
        %v674 = vsub.f32 %v668, %v673
        %v675 = vmul.f32 %v674, 1.442695
        %v676 = vpow.pop %v675
        %v677 = vsel %vm511, %v676, 0.0
        %678 = vadd.xlane.f32.xlu0 %v677
        %v679 = vpop.xlane.xlu0 %678
        %v680 = vrcp.pop %v679
        %v681 = vmul.f32 %v676, %v680
        %v682 = vpack.c.bf16 %v681, %v681
        %s683 = scalar_lea.vmem %s388, 8 [#allocation15]
        %684 = vst.msk [vmem:[%s683] sm:$0xf] %vm543, %v682
        %v686 = vunpack.c.l.b16 %v644
        %v687 = vpack.c.b16 %v686, %v686
        %688 = vrot.lane.b32.xlu0 %v687, 112
        %v689 = vpop.permute.xlu0 %688
        %v691 = vsel %vm511, %v682, 0
        %v694 = vsel %vm548, %v689, 0
        %696 = vmatpush.bf16.msra.mxu0 0
        %697 = vmatpush.bf16.msra.mxu0 0
        %698 = vmatpush.bf16.msra.mxu0 0
        %699 = vmatpush.bf16.msra.mxu0 0
        %700 = vmatpush.bf16.msra.mxu0 0
        %701 = vmatpush.bf16.msra.mxu0 0
        %702 = vmatpush.bf16.msra.mxu0 0
        %703 = vmatpush.bf16.msra.mxu0 %v694
        %704 = vmatmul.bf16.gmra.mxu0 %v691
        %v705 = vpop.f32.mrf.mxu0
        %v706 = vadd.f32 0.0, %v705
        %v707 = vpop.f32.mrf.mxu0
        %708 = vdwg.mxu0
        %v709 = vpack.c.bf16 %v706, %v706
        %711 = vrot.lane.b32.xlu0 %v709, 16
        %v712 = vpop.permute.xlu0 %711
        %vm714 = vcmask 191616
        %715 = vst.msk [vmem:[#allocation4] sm:$0xf] %vm714, %v712
        %v716 = vld [vmem:[#allocation2] sm:$0xf]
        %v717 = vld [vmem:[#allocation3] sm:$0xf]
        %718 = vrot.lane.b32.xlu0 %v571, 104
        %v719 = vpop.permute.xlu0 %718
        %v721 = vunpack.c.l.b16 %v716
        %v722 = vpack.c.b16 %v721, %v721
        %723 = vrot.lane.b32.xlu0 %v722, 104
        %v724 = vpop.permute.xlu0 %723
        %v726 = vsel %vm511, %v719, 0
        %v729 = vsel %vm511, %v724, 0
        %731 = vmatpush.bf16.xpose.msra.mxu0 0
        %732 = vmatpush.bf16.xpose.msra.mxu0 0
        %733 = vmatpush.bf16.xpose.msra.mxu0 0
        %734 = vmatpush.bf16.xpose.msra.mxu0 0
        %735 = vmatpush.bf16.xpose.msra.mxu0 0
        %736 = vmatpush.bf16.xpose.msra.mxu0 0
        %737 = vmatpush.bf16.xpose.msra.mxu0 0
        %738 = vmatpush.bf16.xpose.msra.mxu0 %v729
        %739 = vmatmul.bf16.gmra.mxu0 %v726
        %v740 = vpop.f32.mrf.mxu0
        %v741 = vadd.f32 0.0, %v740
        %v742 = vpop.f32.mrf.mxu0
        %743 = vdwg.mxu0
        %v744 = vsel %vm511, %v741, -inf
        %745 = vmax.xlane.f32.xlu0 %v744
        %v746 = vpop.xlane.xlu0 %745
        %v747 = vsub.f32 %v741, %v746
        %v748 = vmul.f32 %v747, 1.442695
        %v749 = vpow.pop %v748
        %v750 = vsel %vm511, %v749, 0.0
        %751 = vadd.xlane.f32.xlu0 %v750
        %v752 = vpop.xlane.xlu0 %751
        %v753 = vrcp.pop %v752
        %v754 = vmul.f32 %v749, %v753
        %v755 = vpack.c.bf16 %v754, %v754
        %s756 = scalar_lea.vmem %s388, 12 [#allocation15]
        %757 = vst.msk [vmem:[%s756] sm:$0xf] %vm543, %v755
        %v759 = vunpack.c.l.b16 %v717
        %v760 = vpack.c.b16 %v759, %v759
        %761 = vrot.lane.b32.xlu0 %v760, 104
        %v762 = vpop.permute.xlu0 %761
        %v764 = vsel %vm511, %v755, 0
        %v767 = vsel %vm548, %v762, 0
        %769 = vmatpush.bf16.msra.mxu0 0
        %770 = vmatpush.bf16.msra.mxu0 0
        %771 = vmatpush.bf16.msra.mxu0 0
        %772 = vmatpush.bf16.msra.mxu0 0
        %773 = vmatpush.bf16.msra.mxu0 0
        %774 = vmatpush.bf16.msra.mxu0 0
        %775 = vmatpush.bf16.msra.mxu0 0
        %776 = vmatpush.bf16.msra.mxu0 %v767
        %777 = vmatmul.bf16.gmra.mxu0 %v764
        %v778 = vpop.f32.mrf.mxu0
        %v779 = vadd.f32 0.0, %v778
        %v780 = vpop.f32.mrf.mxu0
        %781 = vdwg.mxu0
        %v782 = vpack.c.bf16 %v779, %v779
        %784 = vrot.lane.b32.xlu0 %v782, 24
        %v785 = vpop.permute.xlu0 %784
        %vm787 = vcmask 257216
        %788 = vst.msk [vmem:[#allocation4] sm:$0xf] %vm787, %v785
        %v789 = vld [vmem:[#allocation4] sm:$0xf]
        %v790 = vld [vmem:[#allocation13] sm:$0xf]
        %v791 = vld [vmem:[#allocation13 + $0x4] sm:$0xf]
        %v792 = vld [vmem:[#allocation13 + $0x8] sm:$0xf]
        %v793 = vld [vmem:[#allocation13 + $0xc] sm:$0xf]
        %v794 = vperm.slane %v393, 0
        %v799 = vunpack.c.l.b16 %v790
        %v800 = vunpack.c.l.b16 %v791
        %v801 = vunpack.c.l.b16 %v792
        %v802 = vunpack.c.l.b16 %v793
        %v803 = vpack.c.b16 %v800, %v799
        %v804 = vpack.c.b16 %v802, %v801
        %v808 = vsel %vm491, %v789, 0
        %810 = vmatpush.bf16.msra.mxu0 0
        %811 = vmatpush.bf16.msra.mxu0 0
        %812 = vmatpush.bf16.msra.mxu0 0
        %813 = vmatpush.bf16.msra.mxu0 0
        %814 = vmatpush.bf16.msra.mxu0 0
        %815 = vmatpush.bf16.msra.mxu0 0
        %816 = vmatpush.bf16.msra.mxu0 %v804
        %817 = vmatpush.bf16.msra.mxu0 %v803
        %818 = vmatmul.bf16.gmra.mxu0 %v808
        %v819 = vpop.f32.mrf.mxu0
        %v820 = vadd.f32 %v794, %v819
        %v821 = vpop.f32.mrf.mxu0
        %822 = vdwg.mxu0
        %823 = vst.msk [vmem:[%s381] sm:$0xff] %vm491, %v820
        %s824 = sand.u32 %s183, 1
        %s825 = scalar_lea.sflag [#allocation7], %s824
        %s826 = sand.u32 %s183, 1
        %s827 = smul.addr %s826, 8
        %s828 = scalar_lea.vmem [#allocation14], %s827
        %s829 = sand.u32 %s211, 1
        %s830 = scalar_lea.sflag [#allocation16], %s829
        %s831 = sand.u32 %s211, 1
        %s832 = smul.addr %s831, 16
        %s833 = scalar_lea.vmem [#allocation15], %s832
        // Predicated region
        $region69: #{tpu_custom_call.1} parent=43 // pred_check
          %p834 = pneg %p193
        $region70: #{tpu_custom_call.1} parent=43 // pred_check_branch
          %836 = sbr.rel (%p834) target = $region72
        $region71: #{tpu_custom_call.1} parent=43 // pred_region
          %838 = vsyncadd %s825, 0
          %s839 = sadd.s32 %s35, %s34
          %s840 = smul.addr %s839, 8
          %s841 = scalar_lea.hbm %s6, %s840
          %s843 = sshll.u32 %s828, 4
          %s844 = int_to_ptr.vmem [resolvable:$true] %s843
          %s845 = sshll.u32 %s841, 4
          %s846 = int_to_ptr.hbm [resolvable:$true] %s845
          %848 = dma.vmem_to_hbm [thread:$0]  %s844, 128, %s846, %s825
        $region72: #{tpu_custom_call.1} parent=43 // pred_fallthru
          _
        // Predicated region
        $region73: #{tpu_custom_call.1} parent=43 // pred_check
          %p849 = pneg %p221
        $region74: #{tpu_custom_call.1} parent=43 // pred_check_branch
          %851 = sbr.rel (%p849) target = $region76
        $region75: #{tpu_custom_call.1} parent=43 // pred_region
          %853 = vsyncadd %s830, 0
          %s854 = smul.addr %s34, 4
          %s855 = sadd.s32 %s35, %s854
          %s856 = smul.addr %s855, 4
          %s857 = scalar_lea.hbm %s7, %s856
          %s858 = sshll.u32 %s833, 4
          %s859 = int_to_ptr.vmem [resolvable:$true] %s858
          %s860 = sshll.u32 %s857, 4
          %s861 = int_to_ptr.hbm [resolvable:$true] %s860
          %866 = dma.vmem_to_hbm [thread:$0]  %s859, 256, %s861, %s830, 64, 64, 4
        $region76: #{tpu_custom_call.1} parent=43 // pred_fallthru
          _
      $region44: #{tpu_custom_call.1} parent=5 // pred_fallthru
        _
      %p867 = scmp.le.s32.totalorder 2, %s25
      // Predicated region
      $region77: #{tpu_custom_call.1} parent=5 // pred_check
        %p868 = pneg %p867
      $region78: #{tpu_custom_call.1} parent=5 // pred_check_branch
        %870 = sbr.rel (%p868) target = $region80
      $region79: #{tpu_custom_call.1} parent=5 // pred_region
        %s871 = ssub.s32 %s25, 2
        // Predicated region
        $region81: #{tpu_custom_call.1} parent=79 // pred_check
          %p872 = pneg %p199
        $region82: #{tpu_custom_call.1} parent=79 // pred_check_branch
          %874 = sbr.rel (%p872) target = $region84
        $region83: #{tpu_custom_call.1} parent=79 // pred_region
          %s875 = sand.u32 %s184, 1
          %s876 = scalar_lea.sflag [#allocation7], %s875
          %s877 = sand.u32 %s184, 1
          %s878 = smul.addr %s877, 8
          %s879 = scalar_lea.vmem [#allocation14], %s878
          %881 = dma.done %s876, 128
        $region84: #{tpu_custom_call.1} parent=79 // pred_fallthru
          _
        // Predicated region
        $region85: #{tpu_custom_call.1} parent=79 // pred_check
          %p882 = pneg %p227
        $region86: #{tpu_custom_call.1} parent=79 // pred_check_branch
          %884 = sbr.rel (%p882) target = $region88
        $region87: #{tpu_custom_call.1} parent=79 // pred_region
          %s885 = sand.u32 %s212, 1
          %s886 = scalar_lea.sflag [#allocation16], %s885
          %s887 = sand.u32 %s212, 1
          %s888 = smul.addr %s887, 16
          %s889 = scalar_lea.vmem [#allocation15], %s888
          %891 = dma.done %s886, 256
        $region88: #{tpu_custom_call.1} parent=79 // pred_fallthru
          _
      $region80: #{tpu_custom_call.1} parent=5 // pred_fallthru
        _
    $region6: #{tpu_custom_call.1} parent=1 // loop_footer
      %s29 = sadd.s32 1, %s25
    $region7: #{tpu_custom_call.1} parent=1 // loop_footer_branch
      %24 = sbr.rel target = $region3
    $region8: #{tpu_custom_call.1} parent=1 // loop_exit
      _
    %892 = vsyncpa [#allocation6], 1
    %s893 = scalar_lea.sflag [#allocation6], 1
    %894 = vsyncpa %s893, 1
    %895 = vsyncpa [#allocation9], 1
    %896 = vsyncpa [#allocation12], 1
    %897 = vsyncpa [#allocation7], 1
    %s898 = scalar_lea.sflag [#allocation7], 1
    %899 = vsyncpa %s898, 1
    %900 = vsyncpa [#allocation16], 1
    %s901 = scalar_lea.sflag [#allocation16], 1
    %902 = vsyncpa %s901, 1

// kernel: tpu_custom_call.1
$region0: #{tpu_custom_call.1}
  #allocation0 [shape = 'u32[]', space=smem, size = 0x4, offset = 0x4, fixed_abs, tag = 'smem constant byte address 0x4 - core index']
  #allocation1 [shape = 'u32[72,128]{1,0:T(1,128)}', space=vmem, size = 0x9000, scoped, tag = 'internal scratch']
  #allocation2 [shape = 'bf16[8,32]{1,0:T(8,128)(2,1)}', space=vmem, size = 0x800, scoped, tag = 'scratch operand']
  #allocation3 [shape = 'bf16[8,32]{1,0:T(8,128)(2,1)}', space=vmem, size = 0x800, scoped, tag = 'scratch operand']
  #allocation4 [shape = 'bf16[8,32]{1,0:T(8,128)(2,1)}', space=vmem, size = 0x800, scoped, tag = 'scratch operand']
  %s0 = inlined_call_operand.hbm [shape: bf16[2,8,32], index: 0, kind: input, shape index: {}]
  %s1 = inlined_call_operand.hbm [shape: bf16[32,32], index: 1, kind: input, shape index: {}]
  %s2 = inlined_call_operand.hbm [shape: bf16[32,32], index: 2, kind: input, shape index: {}]
  %s3 = inlined_call_operand.hbm [shape: bf16[32,32], index: 3, kind: input, shape index: {}]
  %s4 = inlined_call_operand.hbm [shape: bf16[32,32], index: 4, kind: input, shape index: {}]
  %s5 = inlined_call_operand.vmem [shape: f32[4,32], index: 5, kind: input, shape index: {}]
  %s6 = inlined_call_operand.hbm [shape: f32[2,8,32], index: 6, kind: output, shape index: {0}]
  %s7 = inlined_call_operand.hbm [shape: bf16[2,4,8,8], index: 7, kind: output, shape index: {1}]
  %8 = xla_tuple %s6, %s7
  %s9 = sld [smem:[#allocation0]]
  $region89: #{tpu_custom_call.1} parent=0
    _
  %s11 = ssub.s32 1, %s9
  %s12 = scalar_select 0, %s11, %s9
  $region1: #{tpu_custom_call.1} parent=0
    #allocation5 [shape = 'u8[4096]{0}', space=vmem, size = 0x1000, scoped, tag = 'input window, operand 0']
    #allocation6 [shape = 's32[2]{0}', space=sflag, size = 0x8, scoped, tag = 'scoped memory for tpu_custom_call.1']
    #allocation7 [shape = 's32[2]{0}', space=sflag, size = 0x8, scoped, tag = 'scoped memory for tpu_custom_call.1']
    #allocation8 [shape = 'u8[8192]{0}', space=vmem, size = 0x2000, scoped, tag = 'input window, operand 1, single buffered']
    #allocation9 [shape = 's32[1]{0}', space=sflag, size = 0x4, scoped, tag = 'scoped memory for tpu_custom_call.1']
    #allocation10 [shape = 'u8[8192]{0}', space=vmem, size = 0x2000, scoped, tag = 'input window, operand 2, single buffered']
    #allocation11 [shape = 'u8[8192]{0}', space=vmem, size = 0x2000, scoped, tag = 'input window, operand 3, single buffered']
    #allocation12 [shape = 's32[1]{0}', space=sflag, size = 0x4, scoped, tag = 'scoped memory for tpu_custom_call.1']
    #allocation13 [shape = 'u8[8192]{0}', space=vmem, size = 0x2000, scoped, tag = 'input window, operand 4, single buffered']
    #allocation14 [shape = 'u8[8192]{0}', space=vmem, size = 0x2000, scoped, tag = 'output window, operand 0']
    #allocation15 [shape = 'u8[16384]{0}', space=vmem, size = 0x4000, scoped, tag = 'output window, operand 1']
    #allocation16 [shape = 's32[2]{0}', space=sflag, size = 0x8, scoped, tag = 'scoped memory for tpu_custom_call.1']
    %13 = vsyncpa [#allocation6], 0
    %s14 = scalar_lea.sflag [#allocation6], 1
    %15 = vsyncpa %s14, 0
    %16 = vsyncpa [#allocation9], 0
    %17 = vsyncpa [#allocation12], 0
    %18 = vsyncpa [#allocation7], 0
    %s19 = scalar_lea.sflag [#allocation7], 1
    %20 = vsyncpa %s19, 0
    %21 = vsyncpa [#allocation16], 0
    %s22 = scalar_lea.sflag [#allocation16], 1
    %23 = vsyncpa %s22, 0
    loop: start=0, step=1, limit=4
    $region2: #{tpu_custom_call.1} parent=1 // loop_pre_header
      _
    $region3: #{tpu_custom_call.1} parent=1 // loop_header
      %s25 = sphi 0, %s29
      %p26 = scmp.ge.s32.totalorder %s25, 4
      %s32 = sphi 0, %s44
      %s33 = sphi 0, %s40
      %s34 = sphi 0, %s32
      %s35 = sphi 0, %s33
      %s36 = sphi 0, %s34
      %s37 = sphi 0, %s35
      %s47 = sphi 0, %s49
      %s50 = sphi 0, %s47
      %s51 = sphi 0, %s50
      %s67 = sphi 0, %s51
      %s71 = sphi 0, %s71
      %s73 = sphi 0, %s71
      %s74 = sphi 0, %s73
      %s88 = sphi 0, %s74
      %s92 = sphi 0, %s92
      %s94 = sphi 0, %s92
      %s95 = sphi 0, %s94
      %s109 = sphi 0, %s95
      %s113 = sphi 0, %s113
      %s115 = sphi 0, %s113
      %s116 = sphi 0, %s115
      %s130 = sphi 0, %s116
      %s134 = sphi 0, %s134
      %s136 = sphi 0, %s134
      %s137 = sphi 0, %s136
      %s151 = sphi 0, %s137
      %s155 = sphi 0, %s155
      %s157 = sphi 0, %s155
      %s158 = sphi 0, %s157
      %s172 = sphi 0, %s158
      %s180 = sphi 0, %s182
      %s183 = sphi 0, %s180
      %s184 = sphi 0, %s183
      %s200 = sphi 0, %s184
      %s208 = sphi 0, %s210
      %s211 = sphi 0, %s208
      %s212 = sphi 0, %s211
      %s228 = sphi 0, %s212
    $region4: #{tpu_custom_call.1} parent=1 // loop_header_branch
      %28 = sbr.rel (%p26) target = $region8
    $region5: #{tpu_custom_call.1} parent=1 // loop_body
      %s30 = ssub.s32 %s25, 1
      %s31 = ssub.s32 %s25, 2
      %s38 = sadd.s32 1, %s33
      %p39 = scmp.ge.s32.totalorder %s38, 1
      %s40 = scalar_select %p39, 0, %s38
      %s41 = sadd.s32 1, %s32
      %s42 = scalar_select %p39, %s41, %s32
      %p43 = scmp.ge.s32.totalorder %s42, 2
      %s44 = scalar_select %p43, 0, %s42
      %s45 = ssub.s32 %s32, %s44
      %p46 = scmp.eq.s32.totalorder %s45, 0
      %s48 = sadd.s32 %s47, 1
      %s49 = scalar_select %p46, %s47, %s48
      %p52 = pneg %p46
      %p53 = scmp.eq.s32.totalorder %s25, 1
      %p54 = por %p52, %p53
      %p55 = scmp.ne.s32.totalorder %s47, %s50
      %p56 = scmp.eq.s32.totalorder %s25, 0
      %p57 = por %p55, %p56
      %p58 = scmp.ne.s32.totalorder %s47, %s50
      %p59 = scmp.eq.s32.totalorder %s30, 1
      %p60 = por %p58, %p59
      %p61 = scmp.ne.s32.totalorder %s50, %s51
      %p62 = scmp.eq.s32.totalorder %s30, 0
      %p63 = por %p61, %p62
      %p64 = scmp.ne.s32.totalorder %s50, %s51
      %p65 = scmp.eq.s32.totalorder %s31, 1
      %p66 = por %p64, %p65
      %p68 = scmp.ne.s32.totalorder %s51, %s67
      %p69 = scmp.eq.s32.totalorder %s31, 0
      %p70 = por %p68, %p69
      %s72 = sadd.s32 %s71, 1
      %p75 = scmp.eq.s32.totalorder %s25, 1
      %p76 = scmp.ne.s32.totalorder %s71, %s73
      %p77 = scmp.eq.s32.totalorder %s25, 0
      %p78 = por %p76, %p77
      %p79 = scmp.ne.s32.totalorder %s71, %s73
      %p80 = scmp.eq.s32.totalorder %s30, 1
      %p81 = por %p79, %p80
      %p82 = scmp.ne.s32.totalorder %s73, %s74
      %p83 = scmp.eq.s32.totalorder %s30, 0
      %p84 = por %p82, %p83
      %p85 = scmp.ne.s32.totalorder %s73, %s74
      %p86 = scmp.eq.s32.totalorder %s31, 1
      %p87 = por %p85, %p86
      %p89 = scmp.ne.s32.totalorder %s74, %s88
      %p90 = scmp.eq.s32.totalorder %s31, 0
      %p91 = por %p89, %p90
      %s93 = sadd.s32 %s92, 1
      %p96 = scmp.eq.s32.totalorder %s25, 1
      %p97 = scmp.ne.s32.totalorder %s92, %s94
      %p98 = scmp.eq.s32.totalorder %s25, 0
      %p99 = por %p97, %p98
      %p100 = scmp.ne.s32.totalorder %s92, %s94
      %p101 = scmp.eq.s32.totalorder %s30, 1
      %p102 = por %p100, %p101
      %p103 = scmp.ne.s32.totalorder %s94, %s95
      %p104 = scmp.eq.s32.totalorder %s30, 0
      %p105 = por %p103, %p104
      %p106 = scmp.ne.s32.totalorder %s94, %s95
      %p107 = scmp.eq.s32.totalorder %s31, 1
      %p108 = por %p106, %p107
      %p110 = scmp.ne.s32.totalorder %s95, %s109
      %p111 = scmp.eq.s32.totalorder %s31, 0
      %p112 = por %p110, %p111
      %s114 = sadd.s32 %s113, 1
      %p117 = scmp.eq.s32.totalorder %s25, 1
      %p118 = scmp.ne.s32.totalorder %s113, %s115
      %p119 = scmp.eq.s32.totalorder %s25, 0
      %p120 = por %p118, %p119
      %p121 = scmp.ne.s32.totalorder %s113, %s115
      %p122 = scmp.eq.s32.totalorder %s30, 1
      %p123 = por %p121, %p122
      %p124 = scmp.ne.s32.totalorder %s115, %s116
      %p125 = scmp.eq.s32.totalorder %s30, 0
      %p126 = por %p124, %p125
      %p127 = scmp.ne.s32.totalorder %s115, %s116
      %p128 = scmp.eq.s32.totalorder %s31, 1
      %p129 = por %p127, %p128
      %p131 = scmp.ne.s32.totalorder %s116, %s130
      %p132 = scmp.eq.s32.totalorder %s31, 0
      %p133 = por %p131, %p132
      %s135 = sadd.s32 %s134, 1
      %p138 = scmp.eq.s32.totalorder %s25, 1
      %p139 = scmp.ne.s32.totalorder %s134, %s136
      %p140 = scmp.eq.s32.totalorder %s25, 0
      %p141 = por %p139, %p140
      %p142 = scmp.ne.s32.totalorder %s134, %s136
      %p143 = scmp.eq.s32.totalorder %s30, 1
      %p144 = por %p142, %p143
      %p145 = scmp.ne.s32.totalorder %s136, %s137
      %p146 = scmp.eq.s32.totalorder %s30, 0
      %p147 = por %p145, %p146
      %p148 = scmp.ne.s32.totalorder %s136, %s137
      %p149 = scmp.eq.s32.totalorder %s31, 1
      %p150 = por %p148, %p149
      %p152 = scmp.ne.s32.totalorder %s137, %s151
      %p153 = scmp.eq.s32.totalorder %s31, 0
      %p154 = por %p152, %p153
      %s156 = sadd.s32 %s155, 1
      %p159 = scmp.eq.s32.totalorder %s25, 1
      %p160 = scmp.ne.s32.totalorder %s155, %s157
      %p161 = scmp.eq.s32.totalorder %s25, 0
      %p162 = por %p160, %p161
      %p163 = scmp.ne.s32.totalorder %s155, %s157
      %p164 = scmp.eq.s32.totalorder %s30, 1
      %p165 = por %p163, %p164
      %p166 = scmp.ne.s32.totalorder %s157, %s158
      %p167 = scmp.eq.s32.totalorder %s30, 0
      %p168 = por %p166, %p167
      %p169 = scmp.ne.s32.totalorder %s157, %s158
      %p170 = scmp.eq.s32.totalorder %s31, 1
      %p171 = por %p169, %p170
      %p173 = scmp.ne.s32.totalorder %s158, %s172
      %p174 = scmp.eq.s32.totalorder %s31, 0
      %p175 = por %p173, %p174
      %s176 = ssub.s32 %s32, %s44
      %s177 = ssub.s32 %s33, %s40
      %s178 = sor.u32 %s176, %s177
      %p179 = scmp.eq.s32.totalorder %s178, 0
      %s181 = sadd.s32 %s180, 1
      %s182 = scalar_select %p179, %s180, %s181
      %p185 = pneg %p179
      %p186 = scmp.eq.s32.totalorder %s25, 1
      %p187 = por %p185, %p186
      %p188 = scmp.ne.s32.totalorder %s180, %s183
      %p189 = scmp.eq.s32.totalorder %s25, 0
      %p190 = por %p188, %p189
      %p191 = scmp.ne.s32.totalorder %s180, %s183
      %p192 = scmp.eq.s32.totalorder %s30, 1
      %p193 = por %p191, %p192
      %p194 = scmp.ne.s32.totalorder %s183, %s184
      %p195 = scmp.eq.s32.totalorder %s30, 0
      %p196 = por %p194, %p195
      %p197 = scmp.ne.s32.totalorder %s183, %s184
      %p198 = scmp.eq.s32.totalorder %s31, 1
      %p199 = por %p197, %p198
      %p201 = scmp.ne.s32.totalorder %s184, %s200
      %p202 = scmp.eq.s32.totalorder %s31, 0
      %p203 = por %p201, %p202
      %s204 = ssub.s32 %s32, %s44
      %s205 = ssub.s32 %s33, %s40
      %s206 = sor.u32 %s204, %s205
      %p207 = scmp.eq.s32.totalorder %s206, 0
      %s209 = sadd.s32 %s208, 1
      %s210 = scalar_select %p207, %s208, %s209
      %p213 = pneg %p207
      %p214 = scmp.eq.s32.totalorder %s25, 1
      %p215 = por %p213, %p214
      %p216 = scmp.ne.s32.totalorder %s208, %s211
      %p217 = scmp.eq.s32.totalorder %s25, 0
      %p218 = por %p216, %p217
      %p219 = scmp.ne.s32.totalorder %s208, %s211
      %p220 = scmp.eq.s32.totalorder %s30, 1
      %p221 = por %p219, %p220
      %p222 = scmp.ne.s32.totalorder %s211, %s212
      %p223 = scmp.eq.s32.totalorder %s30, 0
      %p224 = por %p222, %p223
      %p225 = scmp.ne.s32.totalorder %s211, %s212
      %p226 = scmp.eq.s32.totalorder %s31, 1
      %p227 = por %p225, %p226
      %p229 = scmp.ne.s32.totalorder %s212, %s228
      %p230 = scmp.eq.s32.totalorder %s31, 0
      %p231 = por %p229, %p230
      %p232 = scmp.le.s32.totalorder 1, %s25
      %p233 = scmp.lt.s32.totalorder %s25, 3
      %p234 = pnand %p232, %p233
      %p235 = pneg %p234
      // Predicated region
      $region9: #{tpu_custom_call.1} parent=5 // pred_check
        _
      $region10: #{tpu_custom_call.1} parent=5 // pred_check_branch
        %237 = sbr.rel (%p234) target = $region12
      $region11: #{tpu_custom_call.1} parent=5 // pred_region
        %s238 = ssub.s32 %s25, 1
        // Predicated region
        $region13: #{tpu_custom_call.1} parent=11 // pred_check
          %p239 = pneg %p84
        $region14: #{tpu_custom_call.1} parent=11 // pred_check_branch
          %241 = sbr.rel (%p239) target = $region16
        $region15: #{tpu_custom_call.1} parent=11 // pred_region
          %243 = vsyncadd [#allocation9], 0
          %s244 = sshll.u32 %s1, 4
          %s245 = int_to_ptr.hbm [resolvable:$true] %s244
          %s246 = sshll.u32 [#allocation8], 4
          %s247 = int_to_ptr.vmem [resolvable:$true] %s246
          %252 = dma.hbm_to_vmem [thread:$0]  %s245, 256, %s247, [#allocation9], 64, 64, 4
        $region16: #{tpu_custom_call.1} parent=11 // pred_fallthru
          _
        // Predicated region
        $region17: #{tpu_custom_call.1} parent=11 // pred_check
          %p253 = pneg %p105
        $region18: #{tpu_custom_call.1} parent=11 // pred_check_branch
          %255 = sbr.rel (%p253) target = $region20
        $region19: #{tpu_custom_call.1} parent=11 // pred_region
          %257 = vsyncadd [#allocation9], 0
          %s258 = sshll.u32 %s2, 4
          %s259 = int_to_ptr.hbm [resolvable:$true] %s258
          %s260 = sshll.u32 [#allocation10], 4
          %s261 = int_to_ptr.vmem [resolvable:$true] %s260
          %266 = dma.hbm_to_vmem [thread:$0]  %s259, 256, %s261, [#allocation9], 64, 64, 4
        $region20: #{tpu_custom_call.1} parent=11 // pred_fallthru
          _
        // Predicated region
        $region21: #{tpu_custom_call.1} parent=11 // pred_check
          %p267 = pneg %p126
        $region22: #{tpu_custom_call.1} parent=11 // pred_check_branch
          %269 = sbr.rel (%p267) target = $region24
        $region23: #{tpu_custom_call.1} parent=11 // pred_region
          %271 = vsyncadd [#allocation12], 0
          %s272 = sshll.u32 %s3, 4
          %s273 = int_to_ptr.hbm [resolvable:$true] %s272
          %s274 = sshll.u32 [#allocation11], 4
          %s275 = int_to_ptr.vmem [resolvable:$true] %s274
          %280 = dma.hbm_to_vmem [thread:$0]  %s273, 256, %s275, [#allocation12], 64, 64, 4
        $region24: #{tpu_custom_call.1} parent=11 // pred_fallthru
          _
        // Predicated region
        $region25: #{tpu_custom_call.1} parent=11 // pred_check
          %p281 = pneg %p147
        $region26: #{tpu_custom_call.1} parent=11 // pred_check_branch
          %283 = sbr.rel (%p281) target = $region28
        $region27: #{tpu_custom_call.1} parent=11 // pred_region
          %285 = vsyncadd [#allocation12], 0
          %s286 = sshll.u32 %s4, 4
          %s287 = int_to_ptr.hbm [resolvable:$true] %s286
          %s288 = sshll.u32 [#allocation13], 4
          %s289 = int_to_ptr.vmem [resolvable:$true] %s288
          %294 = dma.hbm_to_vmem [thread:$0]  %s287, 256, %s289, [#allocation12], 64, 64, 4
        $region28: #{tpu_custom_call.1} parent=11 // pred_fallthru
          _
        // Predicated region
        $region29: #{tpu_custom_call.1} parent=11 // pred_check
          %p295 = pneg %p168
        $region30: #{tpu_custom_call.1} parent=11 // pred_check_branch
          %297 = sbr.rel (%p295) target = $region32
        $region31: #{tpu_custom_call.1} parent=11 // pred_region
          _
        $region32: #{tpu_custom_call.1} parent=11 // pred_fallthru
          _
      $region12: #{tpu_custom_call.1} parent=5 // pred_fallthru
        _
      %p298 = scmp.lt.s32.totalorder %s25, 2
      // Predicated region
      $region33: #{tpu_custom_call.1} parent=5 // pred_check
        %p299 = pneg %p298
      $region34: #{tpu_custom_call.1} parent=5 // pred_check_branch
        %301 = sbr.rel (%p299) target = $region36
      $region35: #{tpu_custom_call.1} parent=5 // pred_region
        // Predicated region
        $region37: #{tpu_custom_call.1} parent=35 // pred_check
          %p302 = pneg %p57
        $region38: #{tpu_custom_call.1} parent=35 // pred_check_branch
          %304 = sbr.rel (%p302) target = $region40
        $region39: #{tpu_custom_call.1} parent=35 // pred_region
          %s305 = sand.u32 %s47, 1
          %s306 = scalar_lea.sflag [#allocation6], %s305
          %s307 = sand.u32 %s47, 1
          %s308 = smul.addr %s307, 4
          %s309 = scalar_lea.vmem [#allocation5], %s308
          %311 = vsyncadd %s306, 0
          %s312 = smul.addr %s32, 4
          %s313 = scalar_lea.hbm %s0, %s312
          %s315 = sshll.u32 %s313, 4
          %s316 = int_to_ptr.hbm [resolvable:$true] %s315
          %s317 = sshll.u32 %s309, 4
          %s318 = int_to_ptr.vmem [resolvable:$true] %s317
          %320 = dma.hbm_to_vmem [thread:$0]  %s316, 64, %s318, %s306
        $region40: #{tpu_custom_call.1} parent=35 // pred_fallthru
          _
      $region36: #{tpu_custom_call.1} parent=5 // pred_fallthru
        _
      %p321 = scmp.le.s32.totalorder 1, %s25
      %p322 = scmp.lt.s32.totalorder %s25, 3
      %p323 = pnand %p321, %p322
      %p324 = pneg %p323
      // Predicated region
      $region41: #{tpu_custom_call.1} parent=5 // pred_check
        _
      $region42: #{tpu_custom_call.1} parent=5 // pred_check_branch
        %326 = sbr.rel (%p323) target = $region44
      $region43: #{tpu_custom_call.1} parent=5 // pred_region
        %s327 = ssub.s32 %s25, 1
        %s328 = sand.u32 %s50, 1
        %s329 = scalar_lea.sflag [#allocation6], %s328
        %s330 = sand.u32 %s50, 1
        %s331 = smul.addr %s330, 4
        %s332 = scalar_lea.vmem [#allocation5], %s331
        // Predicated region
        $region45: #{tpu_custom_call.1} parent=43 // pred_check
          %p333 = pneg %p63
        $region46: #{tpu_custom_call.1} parent=43 // pred_check_branch
          %335 = sbr.rel (%p333) target = $region48
        $region47: #{tpu_custom_call.1} parent=43 // pred_region
          %337 = dma.done %s329, 64
        $region48: #{tpu_custom_call.1} parent=43 // pred_fallthru
          _
        // Predicated region
        $region49: #{tpu_custom_call.1} parent=43 // pred_check
          %p338 = pneg %p84
        $region50: #{tpu_custom_call.1} parent=43 // pred_check_branch
          %340 = sbr.rel (%p338) target = $region52
        $region51: #{tpu_custom_call.1} parent=43 // pred_region
          %342 = dma.done [#allocation9], 256
        $region52: #{tpu_custom_call.1} parent=43 // pred_fallthru
          _
        // Predicated region
        $region53: #{tpu_custom_call.1} parent=43 // pred_check
          %p343 = pneg %p105
        $region54: #{tpu_custom_call.1} parent=43 // pred_check_branch
          %345 = sbr.rel (%p343) target = $region56
        $region55: #{tpu_custom_call.1} parent=43 // pred_region
          %347 = dma.done [#allocation9], 256
        $region56: #{tpu_custom_call.1} parent=43 // pred_fallthru
          _
        // Predicated region
        $region57: #{tpu_custom_call.1} parent=43 // pred_check
          %p348 = pneg %p126
        $region58: #{tpu_custom_call.1} parent=43 // pred_check_branch
          %350 = sbr.rel (%p348) target = $region60
        $region59: #{tpu_custom_call.1} parent=43 // pred_region
          %352 = dma.done [#allocation12], 256
        $region60: #{tpu_custom_call.1} parent=43 // pred_fallthru
          _
        // Predicated region
        $region61: #{tpu_custom_call.1} parent=43 // pred_check
          %p353 = pneg %p147
        $region62: #{tpu_custom_call.1} parent=43 // pred_check_branch
          %355 = sbr.rel (%p353) target = $region64
        $region63: #{tpu_custom_call.1} parent=43 // pred_region
          %357 = dma.done [#allocation12], 256
        $region64: #{tpu_custom_call.1} parent=43 // pred_fallthru
          _
        %s358 = sand.u32 %s50, 1
        %s359 = scalar_lea.sflag [#allocation6], %s358
        %s360 = sand.u32 %s50, 1
        %s361 = smul.addr %s360, 4
        %s362 = scalar_lea.vmem [#allocation5], %s361
        %p363 = pneg %p63
        %p364 = pneg %p60
        %p365 = pneg %p84
        %p366 = pneg %p81
        %p367 = pneg %p105
        %p368 = pneg %p102
        %p369 = pneg %p126
        %p370 = pneg %p123
        %p371 = pneg %p147
        %p372 = pneg %p144
        %p373 = pneg %p168
        %p374 = pneg %p165
        %p375 = pneg %p196
        %p376 = pneg %p193
        %s377 = sand.u32 %s183, 1
        %s378 = scalar_lea.sflag [#allocation7], %s377
        %s379 = sand.u32 %s183, 1
        %s380 = smul.addr %s379, 8
        %s381 = scalar_lea.vmem [#allocation14], %s380
        %p382 = pneg %p224
        %p383 = pneg %p221
        %s384 = sand.u32 %s211, 1
        %s385 = scalar_lea.sflag [#allocation16], %s384
        %s386 = sand.u32 %s211, 1
        %s387 = smul.addr %s386, 16
        %s388 = scalar_lea.vmem [#allocation15], %s387
        %v390 = vld [vmem:[%s5] sm:$0x1]
        %v391 = vld [vmem:[%s5 + $0x1] sm:$0x1]
        %v392 = vld [vmem:[%s5 + $0x2] sm:$0x1]
        %v393 = vld [vmem:[%s5 + $0x3] sm:$0x1]
        %p394 = scmp.eq.s32.totalorder %s35, 0
        // Predicated region
        $region65: #{tpu_custom_call.1} parent=43 // pred_check
          %p395 = pneg %p394
        $region66: #{tpu_custom_call.1} parent=43 // pred_check_branch
          %397 = sbr.rel (%p395) target = $region68
        $region67: #{tpu_custom_call.1} parent=43 // pred_region
          %v398 = vld [vmem:[%s332] sm:$0xf]
          %v399 = vld [vmem:[#allocation10] sm:$0xf]
          %v400 = vld [vmem:[#allocation10 + $0x4] sm:$0xf]
          %v401 = vld [vmem:[#allocation10 + $0x8] sm:$0xf]
          %v402 = vld [vmem:[#allocation10 + $0xc] sm:$0xf]
          %v403 = vperm.slane %v391, 0
          %v408 = vunpack.c.l.b16 %v399
          %v409 = vunpack.c.l.b16 %v400
          %v410 = vunpack.c.l.b16 %v401
          %v411 = vunpack.c.l.b16 %v402
          %v412 = vpack.c.b16 %v409, %v408
          %v413 = vpack.c.b16 %v411, %v410
          %vm416 = vcmask 261120
          %v418 = vsel %vm416, %v398, 0
          %420 = vmatpush.bf16.msra.mxu0 0
          %421 = vmatpush.bf16.msra.mxu0 0
          %422 = vmatpush.bf16.msra.mxu0 0
          %423 = vmatpush.bf16.msra.mxu0 0
          %424 = vmatpush.bf16.msra.mxu0 0
          %425 = vmatpush.bf16.msra.mxu0 0
          %426 = vmatpush.bf16.msra.mxu0 %v413
          %427 = vmatpush.bf16.msra.mxu0 %v412
          %428 = vmatmul.bf16.gmra.mxu0 %v418
          %v429 = vpop.f32.mrf.mxu0
          %v430 = vadd.f32 %v403, %v429
          %v431 = vpop.f32.mrf.mxu0
          %432 = vdwg.mxu0
          %v433 = vld [vmem:[#allocation11] sm:$0xf]
          %v434 = vld [vmem:[#allocation11 + $0x4] sm:$0xf]
          %v435 = vld [vmem:[#allocation11 + $0x8] sm:$0xf]
          %v436 = vld [vmem:[#allocation11 + $0xc] sm:$0xf]
          %v437 = vperm.slane %v392, 0
          %v442 = vunpack.c.l.b16 %v433
          %v443 = vunpack.c.l.b16 %v434
          %v444 = vunpack.c.l.b16 %v435
          %v445 = vunpack.c.l.b16 %v436
          %v446 = vpack.c.b16 %v443, %v442
          %v447 = vpack.c.b16 %v445, %v444
          %450 = vmatpush.bf16.msra.mxu0 0
          %451 = vmatpush.bf16.msra.mxu0 0
          %452 = vmatpush.bf16.msra.mxu0 0
          %453 = vmatpush.bf16.msra.mxu0 0
          %454 = vmatpush.bf16.msra.mxu0 0
          %455 = vmatpush.bf16.msra.mxu0 0
          %456 = vmatpush.bf16.msra.mxu0 %v447
          %457 = vmatpush.bf16.msra.mxu0 %v446
          %458 = vmatmul.bf16.gmra.mxu0 %v418
          %v459 = vpop.f32.mrf.mxu0
          %v460 = vadd.f32 %v437, %v459
          %v461 = vpop.f32.mrf.mxu0
          %462 = vdwg.mxu0
          %v463 = vpack.c.bf16 %v430, %v430
          %vm464 = vcmask 257024
          %465 = vst.msk [vmem:[#allocation2] sm:$0xf] %vm464, %v463
          %v466 = vpack.c.bf16 %v460, %v460
          %467 = vst.msk [vmem:[#allocation3] sm:$0xf] %vm464, %v466
        $region68: #{tpu_custom_call.1} parent=43 // pred_fallthru
          _
        %s468 = smul.u32 %s35, 8
        %s469 = sshra.s32 %s468, 3
        %s470 = sand.u32 %s468, 7
        %s471 = smul.addr %s469, 4
        %s472 = scalar_lea.vmem %s332, %s471 [#allocation5]
        %v473 = vld [vmem:[%s472] sm:$0xf]
        %v474 = vld [vmem:[#allocation8] sm:$0xf]
        %v475 = vld [vmem:[#allocation8 + $0x4] sm:$0xf]
        %v476 = vld [vmem:[#allocation8 + $0x8] sm:$0xf]
        %v477 = vld [vmem:[#allocation8 + $0xc] sm:$0xf]
        %v478 = vperm.slane %v390, 0
        %v483 = vunpack.c.l.b16 %v474
        %v484 = vunpack.c.l.b16 %v475
        %v485 = vunpack.c.l.b16 %v476
        %v486 = vunpack.c.l.b16 %v477
        %v487 = vpack.c.b16 %v484, %v483
        %v488 = vpack.c.b16 %v486, %v485
        %vm491 = vcmask 261120
        %v493 = vsel %vm491, %v473, 0
        %495 = vmatpush.bf16.msra.mxu0 0
        %496 = vmatpush.bf16.msra.mxu0 0
        %497 = vmatpush.bf16.msra.mxu0 0
        %498 = vmatpush.bf16.msra.mxu0 0
        %499 = vmatpush.bf16.msra.mxu0 0
        %500 = vmatpush.bf16.msra.mxu0 0
        %501 = vmatpush.bf16.msra.mxu0 %v488
        %502 = vmatpush.bf16.msra.mxu0 %v487
        %503 = vmatmul.bf16.gmra.mxu0 %v493
        %v504 = vpop.f32.mrf.mxu0
        %v505 = vadd.f32 %v478, %v504
        %v506 = vpop.f32.mrf.mxu0
        %507 = vdwg.mxu0
        %v508 = vpack.c.bf16 %v505, %v505
        %v509 = vld [vmem:[#allocation2] sm:$0xf]
        %v510 = vld [vmem:[#allocation3] sm:$0xf]
        %vm511 = vcmask 64512
        %v513 = vsel %vm511, %v508, 0
        %v516 = vsel %vm511, %v509, 0
        %518 = vmatpush.bf16.xpose.msra.mxu0 0
        %519 = vmatpush.bf16.xpose.msra.mxu0 0
        %520 = vmatpush.bf16.xpose.msra.mxu0 0
        %521 = vmatpush.bf16.xpose.msra.mxu0 0
        %522 = vmatpush.bf16.xpose.msra.mxu0 0
        %523 = vmatpush.bf16.xpose.msra.mxu0 0
        %524 = vmatpush.bf16.xpose.msra.mxu0 0
        %525 = vmatpush.bf16.xpose.msra.mxu0 %v516
        %526 = vmatmul.bf16.gmra.mxu0 %v513
        %v527 = vpop.f32.mrf.mxu0
        %v528 = vadd.f32 0.0, %v527
        %v529 = vpop.f32.mrf.mxu0
        %530 = vdwg.mxu0
        %v531 = vsel %vm511, %v528, -inf
        %532 = vmax.xlane.f32.xlu0 %v531
        %v533 = vpop.xlane.xlu0 %532
        %v534 = vsub.f32 %v528, %v533
        %v535 = vmul.f32 %v534, 1.442695
        %v536 = vpow.pop %v535
        %v537 = vsel %vm511, %v536, 0.0
        %538 = vadd.xlane.f32.xlu0 %v537
        %v539 = vpop.xlane.xlu0 %538
        %v540 = vrcp.pop %v539
        %v541 = vmul.f32 %v536, %v540
        %v542 = vpack.c.bf16 %v541, %v541
        %vm543 = vcmask 60416
        %544 = vst.msk [vmem:[%s388] sm:$0xf] %vm543, %v542
        %v546 = vsel %vm511, %v542, 0
        %vm548 = vcmask 1043456
        %v550 = vsel %vm548, %v510, 0
        %552 = vmatpush.bf16.msra.mxu0 0
        %553 = vmatpush.bf16.msra.mxu0 0
        %554 = vmatpush.bf16.msra.mxu0 0
        %555 = vmatpush.bf16.msra.mxu0 0
        %556 = vmatpush.bf16.msra.mxu0 0
        %557 = vmatpush.bf16.msra.mxu0 0
        %558 = vmatpush.bf16.msra.mxu0 0
        %559 = vmatpush.bf16.msra.mxu0 %v550
        %560 = vmatmul.bf16.gmra.mxu0 %v546
        %v561 = vpop.f32.mrf.mxu0
        %v562 = vadd.f32 0.0, %v561
        %v563 = vpop.f32.mrf.mxu0
        %564 = vdwg.mxu0
        %v565 = vpack.c.bf16 %v562, %v562
        %566 = vst.msk [vmem:[#allocation4] sm:$0xf] %vm543, %v565
        %v567 = vld [vmem:[#allocation2] sm:$0xf]
        %v568 = vld [vmem:[#allocation3] sm:$0xf]
        %v570 = vunpack.c.l.b16 %v508
        %v571 = vpack.c.b16 %v570, %v570
        %572 = vrot.lane.b32.xlu0 %v571, 120
        %v573 = vpop.permute.xlu0 %572
        %v575 = vunpack.c.l.b16 %v567
        %v576 = vpack.c.b16 %v575, %v575
        %577 = vrot.lane.b32.xlu0 %v576, 120
        %v578 = vpop.permute.xlu0 %577
        %v580 = vsel %vm511, %v573, 0
        %v583 = vsel %vm511, %v578, 0
        %585 = vmatpush.bf16.xpose.msra.mxu0 0
        %586 = vmatpush.bf16.xpose.msra.mxu0 0
        %587 = vmatpush.bf16.xpose.msra.mxu0 0
        %588 = vmatpush.bf16.xpose.msra.mxu0 0
        %589 = vmatpush.bf16.xpose.msra.mxu0 0
        %590 = vmatpush.bf16.xpose.msra.mxu0 0
        %591 = vmatpush.bf16.xpose.msra.mxu0 0
        %592 = vmatpush.bf16.xpose.msra.mxu0 %v583
        %593 = vmatmul.bf16.gmra.mxu0 %v580
        %v594 = vpop.f32.mrf.mxu0
        %v595 = vadd.f32 0.0, %v594
        %v596 = vpop.f32.mrf.mxu0
        %597 = vdwg.mxu0
        %v598 = vsel %vm511, %v595, -inf
        %599 = vmax.xlane.f32.xlu0 %v598
        %v600 = vpop.xlane.xlu0 %599
        %v601 = vsub.f32 %v595, %v600
        %v602 = vmul.f32 %v601, 1.442695
        %v603 = vpow.pop %v602
        %v604 = vsel %vm511, %v603, 0.0
        %605 = vadd.xlane.f32.xlu0 %v604
        %v606 = vpop.xlane.xlu0 %605
        %v607 = vrcp.pop %v606
        %v608 = vmul.f32 %v603, %v607
        %v609 = vpack.c.bf16 %v608, %v608
        %s610 = scalar_lea.vmem %s388, 4 [#allocation15]
        %611 = vst.msk [vmem:[%s610] sm:$0xf] %vm543, %v609
        %v613 = vunpack.c.l.b16 %v568
        %v614 = vpack.c.b16 %v613, %v613
        %615 = vrot.lane.b32.xlu0 %v614, 120
        %v616 = vpop.permute.xlu0 %615
        %v618 = vsel %vm511, %v609, 0
        %v621 = vsel %vm548, %v616, 0
        %623 = vmatpush.bf16.msra.mxu0 0
        %624 = vmatpush.bf16.msra.mxu0 0
        %625 = vmatpush.bf16.msra.mxu0 0
        %626 = vmatpush.bf16.msra.mxu0 0
        %627 = vmatpush.bf16.msra.mxu0 0
        %628 = vmatpush.bf16.msra.mxu0 0
        %629 = vmatpush.bf16.msra.mxu0 0
        %630 = vmatpush.bf16.msra.mxu0 %v621
        %631 = vmatmul.bf16.gmra.mxu0 %v618
        %v632 = vpop.f32.mrf.mxu0
        %v633 = vadd.f32 0.0, %v632
        %v634 = vpop.f32.mrf.mxu0
        %635 = vdwg.mxu0
        %v636 = vpack.c.bf16 %v633, %v633
        %638 = vrot.lane.b32.xlu0 %v636, 8
        %v639 = vpop.permute.xlu0 %638
        %vm641 = vcmask 126016
        %642 = vst.msk [vmem:[#allocation4] sm:$0xf] %vm641, %v639
        %v643 = vld [vmem:[#allocation2] sm:$0xf]
        %v644 = vld [vmem:[#allocation3] sm:$0xf]
        %645 = vrot.lane.b32.xlu0 %v571, 112
        %v646 = vpop.permute.xlu0 %645
        %v648 = vunpack.c.l.b16 %v643
        %v649 = vpack.c.b16 %v648, %v648
        %650 = vrot.lane.b32.xlu0 %v649, 112
        %v651 = vpop.permute.xlu0 %650
        %v653 = vsel %vm511, %v646, 0
        %v656 = vsel %vm511, %v651, 0
        %658 = vmatpush.bf16.xpose.msra.mxu0 0
        %659 = vmatpush.bf16.xpose.msra.mxu0 0
        %660 = vmatpush.bf16.xpose.msra.mxu0 0
        %661 = vmatpush.bf16.xpose.msra.mxu0 0
        %662 = vmatpush.bf16.xpose.msra.mxu0 0
        %663 = vmatpush.bf16.xpose.msra.mxu0 0
        %664 = vmatpush.bf16.xpose.msra.mxu0 0
        %665 = vmatpush.bf16.xpose.msra.mxu0 %v656
        %666 = vmatmul.bf16.gmra.mxu0 %v653
        %v667 = vpop.f32.mrf.mxu0
        %v668 = vadd.f32 0.0, %v667
        %v669 = vpop.f32.mrf.mxu0
        %670 = vdwg.mxu0
        %v671 = vsel %vm511, %v668, -inf
        %672 = vmax.xlane.f32.xlu0 %v671
        %v673 = vpop.xlane.xlu0 %672
        %v674 = vsub.f32 %v668, %v673
        %v675 = vmul.f32 %v674, 1.442695
        %v676 = vpow.pop %v675
        %v677 = vsel %vm511, %v676, 0.0
        %678 = vadd.xlane.f32.xlu0 %v677
        %v679 = vpop.xlane.xlu0 %678
        %v680 = vrcp.pop %v679
        %v681 = vmul.f32 %v676, %v680
        %v682 = vpack.c.bf16 %v681, %v681
        %s683 = scalar_lea.vmem %s388, 8 [#allocation15]
        %684 = vst.msk [vmem:[%s683] sm:$0xf] %vm543, %v682
        %v686 = vunpack.c.l.b16 %v644
        %v687 = vpack.c.b16 %v686, %v686
        %688 = vrot.lane.b32.xlu0 %v687, 112
        %v689 = vpop.permute.xlu0 %688
        %v691 = vsel %vm511, %v682, 0
        %v694 = vsel %vm548, %v689, 0
        %696 = vmatpush.bf16.msra.mxu0 0
        %697 = vmatpush.bf16.msra.mxu0 0
        %698 = vmatpush.bf16.msra.mxu0 0
        %699 = vmatpush.bf16.msra.mxu0 0
        %700 = vmatpush.bf16.msra.mxu0 0
        %701 = vmatpush.bf16.msra.mxu0 0
        %702 = vmatpush.bf16.msra.mxu0 0
        %703 = vmatpush.bf16.msra.mxu0 %v694
        %704 = vmatmul.bf16.gmra.mxu0 %v691
        %v705 = vpop.f32.mrf.mxu0
        %v706 = vadd.f32 0.0, %v705
        %v707 = vpop.f32.mrf.mxu0
        %708 = vdwg.mxu0
        %v709 = vpack.c.bf16 %v706, %v706
        %711 = vrot.lane.b32.xlu0 %v709, 16
        %v712 = vpop.permute.xlu0 %711
        %vm714 = vcmask 191616
        %715 = vst.msk [vmem:[#allocation4] sm:$0xf] %vm714, %v712
        %v716 = vld [vmem:[#allocation2] sm:$0xf]
        %v717 = vld [vmem:[#allocation3] sm:$0xf]
        %718 = vrot.lane.b32.xlu0 %v571, 104
        %v719 = vpop.permute.xlu0 %718
        %v721 = vunpack.c.l.b16 %v716
        %v722 = vpack.c.b16 %v721, %v721
        %723 = vrot.lane.b32.xlu0 %v722, 104
        %v724 = vpop.permute.xlu0 %723
        %v726 = vsel %vm511, %v719, 0
        %v729 = vsel %vm511, %v724, 0
        %731 = vmatpush.bf16.xpose.msra.mxu0 0
        %732 = vmatpush.bf16.xpose.msra.mxu0 0
        %733 = vmatpush.bf16.xpose.msra.mxu0 0
        %734 = vmatpush.bf16.xpose.msra.mxu0 0
        %735 = vmatpush.bf16.xpose.msra.mxu0 0
        %736 = vmatpush.bf16.xpose.msra.mxu0 0
        %737 = vmatpush.bf16.xpose.msra.mxu0 0
        %738 = vmatpush.bf16.xpose.msra.mxu0 %v729
        %739 = vmatmul.bf16.gmra.mxu0 %v726
        %v740 = vpop.f32.mrf.mxu0
        %v741 = vadd.f32 0.0, %v740
        %v742 = vpop.f32.mrf.mxu0
        %743 = vdwg.mxu0
        %v744 = vsel %vm511, %v741, -inf
        %745 = vmax.xlane.f32.xlu0 %v744
        %v746 = vpop.xlane.xlu0 %745
        %v747 = vsub.f32 %v741, %v746
        %v748 = vmul.f32 %v747, 1.442695
        %v749 = vpow.pop %v748
        %v750 = vsel %vm511, %v749, 0.0
        %751 = vadd.xlane.f32.xlu0 %v750
        %v752 = vpop.xlane.xlu0 %751
        %v753 = vrcp.pop %v752
        %v754 = vmul.f32 %v749, %v753
        %v755 = vpack.c.bf16 %v754, %v754
        %s756 = scalar_lea.vmem %s388, 12 [#allocation15]
        %757 = vst.msk [vmem:[%s756] sm:$0xf] %vm543, %v755
        %v759 = vunpack.c.l.b16 %v717
        %v760 = vpack.c.b16 %v759, %v759
        %761 = vrot.lane.b32.xlu0 %v760, 104
        %v762 = vpop.permute.xlu0 %761
        %v764 = vsel %vm511, %v755, 0
        %v767 = vsel %vm548, %v762, 0
        %769 = vmatpush.bf16.msra.mxu0 0
        %770 = vmatpush.bf16.msra.mxu0 0
        %771 = vmatpush.bf16.msra.mxu0 0
        %772 = vmatpush.bf16.msra.mxu0 0
        %773 = vmatpush.bf16.msra.mxu0 0
        %774 = vmatpush.bf16.msra.mxu0 0
        %775 = vmatpush.bf16.msra.mxu0 0
        %776 = vmatpush.bf16.msra.mxu0 %v767
        %777 = vmatmul.bf16.gmra.mxu0 %v764
        %v778 = vpop.f32.mrf.mxu0
        %v779 = vadd.f32 0.0, %v778
        %v780 = vpop.f32.mrf.mxu0
        %781 = vdwg.mxu0
        %v782 = vpack.c.bf16 %v779, %v779
        %784 = vrot.lane.b32.xlu0 %v782, 24
        %v785 = vpop.permute.xlu0 %784
        %vm787 = vcmask 257216
        %788 = vst.msk [vmem:[#allocation4] sm:$0xf] %vm787, %v785
        %v789 = vld [vmem:[#allocation4] sm:$0xf]
        %v790 = vld [vmem:[#allocation13] sm:$0xf]
        %v791 = vld [vmem:[#allocation13 + $0x4] sm:$0xf]
        %v792 = vld [vmem:[#allocation13 + $0x8] sm:$0xf]
        %v793 = vld [vmem:[#allocation13 + $0xc] sm:$0xf]
        %v794 = vperm.slane %v393, 0
        %v799 = vunpack.c.l.b16 %v790
        %v800 = vunpack.c.l.b16 %v791
        %v801 = vunpack.c.l.b16 %v792
        %v802 = vunpack.c.l.b16 %v793
        %v803 = vpack.c.b16 %v800, %v799
        %v804 = vpack.c.b16 %v802, %v801
        %v808 = vsel %vm491, %v789, 0
        %810 = vmatpush.bf16.msra.mxu0 0
        %811 = vmatpush.bf16.msra.mxu0 0
        %812 = vmatpush.bf16.msra.mxu0 0
        %813 = vmatpush.bf16.msra.mxu0 0
        %814 = vmatpush.bf16.msra.mxu0 0
        %815 = vmatpush.bf16.msra.mxu0 0
        %816 = vmatpush.bf16.msra.mxu0 %v804
        %817 = vmatpush.bf16.msra.mxu0 %v803
        %818 = vmatmul.bf16.gmra.mxu0 %v808
        %v819 = vpop.f32.mrf.mxu0
        %v820 = vadd.f32 %v794, %v819
        %v821 = vpop.f32.mrf.mxu0
        %822 = vdwg.mxu0
        %823 = vst.msk [vmem:[%s381] sm:$0xff] %vm491, %v820
        %s824 = sand.u32 %s183, 1
        %s825 = scalar_lea.sflag [#allocation7], %s824
        %s826 = sand.u32 %s183, 1
        %s827 = smul.addr %s826, 8
        %s828 = scalar_lea.vmem [#allocation14], %s827
        %s829 = sand.u32 %s211, 1
        %s830 = scalar_lea.sflag [#allocation16], %s829
        %s831 = sand.u32 %s211, 1
        %s832 = smul.addr %s831, 16
        %s833 = scalar_lea.vmem [#allocation15], %s832
        // Predicated region
        $region69: #{tpu_custom_call.1} parent=43 // pred_check
          %p834 = pneg %p193
        $region70: #{tpu_custom_call.1} parent=43 // pred_check_branch
          %836 = sbr.rel (%p834) target = $region72
        $region71: #{tpu_custom_call.1} parent=43 // pred_region
          %838 = vsyncadd %s825, 0
          %s839 = sadd.s32 %s35, %s34
          %s840 = smul.addr %s839, 8
          %s841 = scalar_lea.hbm %s6, %s840
          %s843 = sshll.u32 %s828, 4
          %s844 = int_to_ptr.vmem [resolvable:$true] %s843
          %s845 = sshll.u32 %s841, 4
          %s846 = int_to_ptr.hbm [resolvable:$true] %s845
          %848 = dma.vmem_to_hbm [thread:$0]  %s844, 128, %s846, %s825
        $region72: #{tpu_custom_call.1} parent=43 // pred_fallthru
          _
        // Predicated region
        $region73: #{tpu_custom_call.1} parent=43 // pred_check
          %p849 = pneg %p221
        $region74: #{tpu_custom_call.1} parent=43 // pred_check_branch
          %851 = sbr.rel (%p849) target = $region76
        $region75: #{tpu_custom_call.1} parent=43 // pred_region
          %853 = vsyncadd %s830, 0
          %s854 = smul.addr %s34, 4
          %s855 = sadd.s32 %s35, %s854
          %s856 = smul.addr %s855, 4
          %s857 = scalar_lea.hbm %s7, %s856
          %s858 = sshll.u32 %s833, 4
          %s859 = int_to_ptr.vmem [resolvable:$true] %s858
          %s860 = sshll.u32 %s857, 4
          %s861 = int_to_ptr.hbm [resolvable:$true] %s860
          %866 = dma.vmem_to_hbm [thread:$0]  %s859, 256, %s861, %s830, 64, 64, 4
        $region76: #{tpu_custom_call.1} parent=43 // pred_fallthru
          _
      $region44: #{tpu_custom_call.1} parent=5 // pred_fallthru
        _
      %p867 = scmp.le.s32.totalorder 2, %s25
      // Predicated region
      $region77: #{tpu_custom_call.1} parent=5 // pred_check
        %p868 = pneg %p867
      $region78: #{tpu_custom_call.1} parent=5 // pred_check_branch
        %870 = sbr.rel (%p868) target = $region80
      $region79: #{tpu_custom_call.1} parent=5 // pred_region
        %s871 = ssub.s32 %s25, 2
        // Predicated region
        $region81: #{tpu_custom_call.1} parent=79 // pred_check
          %p872 = pneg %p199
        $region82: #{tpu_custom_call.1} parent=79 // pred_check_branch
          %874 = sbr.rel (%p872) target = $region84
        $region83: #{tpu_custom_call.1} parent=79 // pred_region
          %s875 = sand.u32 %s184, 1
          %s876 = scalar_lea.sflag [#allocation7], %s875
          %s877 = sand.u32 %s184, 1
          %s878 = smul.addr %s877, 8
          %s879 = scalar_lea.vmem [#allocation14], %s878
          %881 = dma.done %s876, 128
        $region84: #{tpu_custom_call.1} parent=79 // pred_fallthru
          _
        // Predicated region
        $region85: #{tpu_custom_call.1} parent=79 // pred_check
          %p882 = pneg %p227
        $region86: #{tpu_custom_call.1} parent=79 // pred_check_branch
          %884 = sbr.rel (%p882) target = $region88
        $region87: #{tpu_custom_call.1} parent=79 // pred_region
          %s885 = sand.u32 %s212, 1
          %s886 = scalar_lea.sflag [#allocation16], %s885
          %s887 = sand.u32 %s212, 1
          %s888 = smul.addr %s887, 16
          %s889 = scalar_lea.vmem [#allocation15], %s888
          %891 = dma.done %s886, 256
        $region88: #{tpu_custom_call.1} parent=79 // pred_fallthru
          _
      $region80: #{tpu_custom_call.1} parent=5 // pred_fallthru
        _
    $region6: #{tpu_custom_call.1} parent=1 // loop_footer
      %s29 = sadd.s32 1, %s25
    $region7: #{tpu_custom_call.1} parent=1 // loop_footer_branch
      %24 = sbr.rel target = $region3
    $region8: #{tpu_custom_call.1} parent=1 // loop_exit
      _
    %892 = vsyncpa [#allocation6], 1
    %s893 = scalar_lea.sflag [#allocation6], 1
    %894 = vsyncpa %s893, 1
    %895 = vsyncpa [#allocation9], 1
    %896 = vsyncpa [#allocation12], 1
    %897 = vsyncpa [#allocation7], 1
    %s898 = scalar_lea.sflag [#allocation7], 1
    %899 = vsyncpa %s898, 1
    %900 = vsyncpa [#allocation16], 1
    %s901 = scalar_lea.sflag [#allocation16], 1
    %902 = vsyncpa %s901, 1

</llo_original>
